<compile_context>
chip_gen: v7x
topology: tpu7x:2x2x1
jax: 0.10.0
libtpu: 0.0.40
codegen_flags: <defaults>
</compile_context>

<pallas_src>
import functools

import jax
import jax.numpy as jnp
from jax import lax
from jax.experimental import pallas as pl
from jax.experimental.pallas import tpu as pltpu


def _round_up(x, m):
    return (x + m - 1) // m * m


def _cdiv(a, b):
    return -(-a // b)


# ---------------------------------------------------------------------------
# Kernel
# ---------------------------------------------------------------------------
def ddpg_actor_kernel(obs_ref, w1_ref, w2_ref, w3_ref, w4_ref, vec_ref, mu_ref,
                      *, feature_dim, f_pad, h_pad, a_pad, compute_dtype):
    """One batch tile of the DDPG actor MLP.

    obs_ref : (TILE_B, R_pad)  bf16   (streamed per grid step)
    w*_ref  : zero-padded bf16 weights (in_pad, out_pad), grid-resident
    vec_ref : (8, W) f32  -- rows: b1, gamma, beta, b2, b3, b4, 0, 0
    mu_ref  : (TILE_B, A_pad) f32
    """
    vecs = vec_ref[...]
    b1 = vecs[0:1, 0:f_pad]
    gamma = vecs[1:2, 0:f_pad].astype(compute_dtype)
    beta = vecs[2:3, 0:f_pad].astype(compute_dtype)
    b2 = vecs[3:4, 0:h_pad]
    b3 = vecs[4:5, 0:h_pad]
    b4 = vecs[5:6, 0:a_pad]

    x = obs_ref[...]                                    # already bf16

    # Linear 1 (bf16 MXU, f32 accumulation)
    h = jnp.dot(x, w1_ref[...], preferred_element_type=jnp.float32) + b1

    # LayerNorm over the *real* feature_dim (eps = 1e-5, affine).
    # Invariant (see pack_params): padded lanes of h are exactly 0 (zero-padded
    # w1 columns / b1 / obs lanes), so plain sums over all f_pad lanes equal
    # sums over the real feature_dim lanes -- no iota/mask needed.
    inv_n = 1.0 / float(feature_dim)
    mean = jnp.sum(h, axis=-1, keepdims=True) * inv_n
    var = jnp.sum(h * h, axis=-1, keepdims=True) * inv_n - mean * mean
    var = jnp.maximum(var, 0.0)
    h = ((h - mean) * lax.rsqrt(var + 1e-5)).astype(compute_dtype)
    # Padded lanes become -mean*rsqrt, but gamma/beta are zero-padded so the
    # affine result there is 0 (and padded w2 rows are 0 anyway).
    h = jnp.tanh(h * gamma + beta).astype(jnp.bfloat16)

    # Linear 2 + ReLU
    h = jnp.dot(h, w2_ref[...], preferred_element_type=jnp.float32) + b2
    h = jnp.maximum(h.astype(compute_dtype), 0.0).astype(jnp.bfloat16)

    # Linear 3 + ReLU
    h = jnp.dot(h, w3_ref[...], preferred_element_type=jnp.float32) + b3
    h = jnp.maximum(h.astype(compute_dtype), 0.0).astype(jnp.bfloat16)

    # Linear 4 (to action_dim) + final tanh
    mu = jnp.dot(h, w4_ref[...], preferred_element_type=jnp.float32) + b4
    mu_ref[...] = jnp.tanh(mu.astype(compute_dtype)).astype(mu_ref.dtype)
    # TODO(synk): utils.TruncatedNormal is a distribution object (sample /
    # log_prob); we only produce its parameters (mu, std).


# ---------------------------------------------------------------------------
# Parameter packing
# ---------------------------------------------------------------------------
def pack_params(params):
    """Pads weights to lane-dense (multiple-of-128) shapes in bf16 and packs
    the six small vectors into one f32 slab (1 DMA instead of 6).

    INVARIANT the kernel's LayerNorm relies on: all padding regions of w1, b1
    (and of obs in the wrapper) are exactly 0, so the first matmul produces
    exactly-0 padded lanes. Keep this true if the quantization scheme changes.
    """
    repr_dim, feature_dim = params["w1"].shape
    hidden_dim = params["w2"].shape[1]
    action_dim = params["w4"].shape[1]

    r_pad = _round_up(repr_dim, 128)
    f_pad = _round_up(feature_dim, 128)
    h_pad = _round_up(hidden_dim, 128)
    a_pad = _round_up(action_dim, 128)
    w_cols = max(f_pad, h_pad, a_pad)

    def pad_w(x, rp, cp):
        return jnp.pad(x, ((0, rp - x.shape[0]),
                           (0, cp - x.shape[1]))).astype(jnp.bfloat16)

    def pad_v(x):
        x = jnp.asarray(x, jnp.float32).reshape(1, -1)
        return jnp.pad(x, ((0, 0), (0, w_cols - x.shape[1])))

    vecs = jnp.concatenate(
        [pad_v(params["b1"]), pad_v(params["gamma"]), pad_v(params["beta"]),
         pad_v(params["b2"]), pad_v(params["b3"]), pad_v(params["b4"]),
         jnp.zeros((2, w_cols), jnp.float32)], axis=0)

    return {
        "w1": pad_w(params["w1"], r_pad, f_pad),
        "w2": pad_w(params["w2"], f_pad, h_pad),
        "w3": pad_w(params["w3"], h_pad, h_pad),
        "w4": pad_w(params["w4"], h_pad, a_pad),
        "vecs": vecs,
        "dims": (repr_dim, feature_dim, hidden_dim, action_dim,
                 r_pad, f_pad, h_pad, a_pad),
    }


# ---------------------------------------------------------------------------
# Device introspection helpers (safe fallbacks everywhere)
# ---------------------------------------------------------------------------
def _device_kind():
    try:
        return jax.devices()[0].device_kind.lower()
    except Exception:
        return ""


def _vmem_capacity(kind):
    try:
        return int(pltpu.get_tpu_info().vmem_capacity_bytes)
    except Exception:
        return (64 << 20) if "v7" in kind else (128 << 20)


# ---------------------------------------------------------------------------
# Wrapper
# ---------------------------------------------------------------------------
def ddpg_actor_forward(obs, packed, std):
    """Runs the whole MLP in one Pallas kernel. Returns (mu, std)."""
    (repr_dim, feature_dim, hidden_dim, action_dim,
     r_pad, f_pad, h_pad, a_pad) = packed["dims"]
    B = obs.shape[0]

    kind = _device_kind()
    # bf16 VPU/EUP exists on v6e/v7x; keep elementwise math f32 elsewhere.
    compute_dtype = jnp.bfloat16 if ("v6" in kind or "v7" in kind) else jnp.float32
    two_tensorcores = "v7" in kind

    w_bytes = sum(int(packed[k].size) * packed[k].dtype.itemsize
                  for k in ("w1", "w2", "w3", "w4"))
    vec_bytes = int(packed["vecs"].size) * 4

    def vmem_needed(tb):
        # 2x double-buffered obs (bf16) + mu (f32) tiles, single-buffered
        # resident weights / vec slab, plus slack for compiler scratch.
        return (2 * (tb * r_pad * 2 + tb * a_pad * 4)
                + w_bytes + vec_bytes + (2 << 20))

    vmem_cap = _vmem_capacity(kind)
    vmem_budget = int(vmem_cap * 0.85)     # ~56 MiB on v7x, ~108 MiB on v5e/v6e

    # Balanced batch tiling, rows rounded to 16 (bf16 (16,128) sublane packing).
    b8 = _round_up(max(B, 1), 8)
    max_tile = 512
    n_tiles = _cdiv(b8, max_tile)
    if two_tensorcores and n_tiles == 1 and b8 >= 32:
        n_tiles = 2                        # shard the grid across both TCs
    tile_b = _round_up(_cdiv(b8, n_tiles), 16)
    while vmem_needed(tile_b) > vmem_budget and tile_b > 16:
        tile_b = max(16, _round_up(tile_b // 2, 16))
    n_tiles = _cdiv(b8, tile_b)
    if two_tensorcores and n_tiles == 1 and b8 >= 32:
        n_tiles = 2
    tile_b = _round_up(_cdiv(b8, n_tiles), 16)   # rebalance (only shrinks)
    b_pad = n_tiles * tile_b

    # Pad + cast obs to bf16 in the wrapper (fused by XLA); skip when aligned.
    obs_bf = obs.astype(jnp.bfloat16)
    if b_pad == B and r_pad == repr_dim:
        obs_p = obs_bf
    else:
        obs_p = jnp.pad(obs_bf, ((0, b_pad - B), (0, r_pad - repr_dim)))

    kernel = functools.partial(
        ddpg_actor_kernel,
        feature_dim=feature_dim, f_pad=f_pad, h_pad=h_pad, a_pad=a_pad,
        compute_dtype=compute_dtype)

    flops = 2 * b_pad * (r_pad * f_pad + f_pad * h_pad
                         + h_pad * h_pad + h_pad * a_pad)
    transcendentals = b_pad * (f_pad + a_pad + 1)          # tanh + rsqrt
    bytes_accessed = (int(obs_p.size) * 2 + w_bytes + vec_bytes
                      + b_pad * a_pad * 4)
    vmem_limit = int(min(max(vmem_needed(tile_b), 32 << 20), vmem_cap))

    def w_spec(shape, single_buffer):
        if single_buffer:
            # Grid-invariant operand: one VMEM buffer is enough (never refetched).
            return pl.BlockSpec(shape, lambda i: (0, 0),
                                pipeline_mode=pl.Buffered(1))
        return pl.BlockSpec(shape, lambda i: (0, 0))

    def run(single_buffer_weights):
        return pl.pallas_call(
            kernel,
            out_shape=jax.ShapeDtypeStruct((b_pad, a_pad), jnp.float32),
            grid=(n_tiles,),
            in_specs=[
                pl.BlockSpec((tile_b, r_pad), lambda i: (i, 0)),   # obs stream
                w_spec((r_pad, f_pad), single_buffer_weights),     # w1
                w_spec((f_pad, h_pad), single_buffer_weights),     # w2
                w_spec((h_pad, h_pad), single_buffer_weights),     # w3
                w_spec((h_pad, a_pad), single_buffer_weights),     # w4
                w_spec((8, packed["vecs"].shape[1]), single_buffer_weights),
            ],
            out_specs=pl.BlockSpec((tile_b, a_pad), lambda i: (i, 0)),
            compiler_params=pltpu.CompilerParams(
                dimension_semantics=("parallel",),
                vmem_limit_bytes=vmem_limit),
            cost_estimate=pl.CostEstimate(
                flops=flops, transcendentals=transcendentals,
                bytes_accessed=bytes_accessed),
        )(obs_p, packed["w1"], packed["w2"], packed["w3"], packed["w4"],
          packed["vecs"])

    try:
        mu_p = run(True)
    except Exception:
        # Fallback: default double-buffered resident operands (always valid).
        mu_p = run(False)

    mu = mu_p[:B, :action_dim]
    # std is a pure constant of the distribution -- no kernel output needed.
    std_out = jnp.full((B, action_dim), std, dtype=jnp.float32)
    return mu, std_out


# ---------------------------------------------------------------------------
# Synthetic init + reference
# ---------------------------------------------------------------------------
def init_params(key, repr_dim, feature_dim, hidden_dim, action_dim):
    """Deterministic synthetic weights (weights stored transposed as
    (in_features, out_features))."""
    ks = jax.random.split(key, 8)

    def lin(kw, kb, fan_in, fan_out):
        scale = 1.0 / jnp.sqrt(jnp.float32(fan_in))
        w = jax.random.uniform(kw, (fan_in, fan_out), jnp.float32, -scale, scale)
        b = jax.random.uniform(kb, (fan_out,), jnp.float32, -scale, scale)
        return w, b

    w1, b1 = lin(ks[0], ks[1], repr_dim, feature_dim)
    w2, b2 = lin(ks[2], ks[3], feature_dim, hidden_dim)
    w3, b3 = lin(ks[4], ks[5], hidden_dim, hidden_dim)
    w4, b4 = lin(ks[6], ks[7], hidden_dim, action_dim)
    return {
        "w1": w1, "b1": b1,
        "gamma": jnp.ones((feature_dim,), jnp.float32),
        "beta": jnp.zeros((feature_dim,), jnp.float32),
        "w2": w2, "b2": b2,
        "w3": w3, "b3": b3,
        "w4": w4, "b4": b4,
    }


def ref_forward(obs, params):
    """Pure-JAX reference (f32 math) using the same bf16-rounded obs and
    weights that the kernel sees (apples-to-apples)."""
    def q(x):
        return x.astype(jnp.bfloat16).astype(jnp.float32)

    h = q(obs) @ q(params["w1"]) + params["b1"]
    m = h.mean(-1, keepdims=True)
    v = ((h - m) ** 2).mean(-1, keepdims=True)
    h = (h - m) / jnp.sqrt(v + 1e-5) * params["gamma"] + params["beta"]
    h = jnp.tanh(h)
    h = jnp.maximum(h @ q(params["w2"]) + params["b2"], 0.0)
    h = jnp.maximum(h @ q(params["w3"]) + params["b3"], 0.0)
    return jnp.tanh(h @ q(params["w4"]) + params["b4"])


if __name__ == "__main__":
    # Small shapes; deliberately NOT lane/sublane aligned to exercise padding
    # and the padded-lane LayerNorm (B=10, feature_dim=50, action_dim=6).
    B, repr_dim, feature_dim, hidden_dim, action_dim = 10, 64, 50, 32, 6
    std = 0.1

    key = jax.random.PRNGKey(0)
    k_obs, k_par = jax.random.split(key)
    obs = jax.random.normal(k_obs, (B, repr_dim), jnp.float32)
    params = init_params(k_par, repr_dim, feature_dim, hidden_dim, action_dim)
    packed = pack_params(params)

    mu, std_out = ddpg_actor_forward(obs, packed, std)
    jax.block_until_ready((mu, std_out))

    mu_ref = ref_forward(obs, params)
    assert mu.shape == (B, action_dim)
    assert bool(jnp.allclose(mu, mu_ref, atol=3e-2, rtol=3e-2)), "mu mismatch"
    assert bool(jnp.allclose(std_out, jnp.full((B, action_dim), std))), "std mismatch"
    print("KERNEL_OK")
</pallas_src>

<mosaic_0001>
module attributes {stable_mosaic.version = 11 : i64} {
  func.func @ddpg_actor_kernel(%arg0: i32, %arg1: memref<16x128xbf16, #tpu.memory_space<vmem>>, %arg2: memref<128x128xbf16, #tpu.memory_space<vmem>>, %arg3: memref<128x128xbf16, #tpu.memory_space<vmem>>, %arg4: memref<128x128xbf16, #tpu.memory_space<vmem>>, %arg5: memref<128x128xbf16, #tpu.memory_space<vmem>>, %arg6: memref<8x128xf32, #tpu.memory_space<vmem>>, %arg7: memref<16x128xf32, #tpu.memory_space<vmem>>) attributes {dimension_semantics = [#tpu.dimension_semantics<parallel>], iteration_bounds = array<i64: 1>, scalar_prefetch = 0 : i64, scratch_operands = 0 : i64, tpu.core_type = #tpu.core_type<tc>, window_params = [{transform_indices = @transform_0, window_bounds = array<i64: 16, 128>}, {pipeline_mode = #tpu.pipeline_mode<synchronous>, transform_indices = @transform_1, window_bounds = array<i64: 128, 128>}, {pipeline_mode = #tpu.pipeline_mode<synchronous>, transform_indices = @transform_2, window_bounds = array<i64: 128, 128>}, {pipeline_mode = #tpu.pipeline_mode<synchronous>, transform_indices = @transform_3, window_bounds = array<i64: 128, 128>}, {pipeline_mode = #tpu.pipeline_mode<synchronous>, transform_indices = @transform_4, window_bounds = array<i64: 128, 128>}, {pipeline_mode = #tpu.pipeline_mode<synchronous>, transform_indices = @transform_5, window_bounds = array<i64: 8, 128>}, {transform_indices = @transform_6, window_bounds = array<i64: 16, 128>}]} {
    %c0 = arith.constant 0 : index
    %c0_0 = arith.constant 0 : index
    %0 = vector.load %arg6[%c0, %c0_0] : memref<8x128xf32, #tpu.memory_space<vmem>>, vector<8x128xf32>
    %1 = vector.extract_strided_slice %0 {offsets = [0, 0], sizes = [1, 128], strides = [1, 1]} : vector<8x128xf32> to vector<1x128xf32>
    %2 = vector.extract_strided_slice %0 {offsets = [1, 0], sizes = [1, 128], strides = [1, 1]} : vector<8x128xf32> to vector<1x128xf32>
    %3 = vector.extract_strided_slice %0 {offsets = [2, 0], sizes = [1, 128], strides = [1, 1]} : vector<8x128xf32> to vector<1x128xf32>
    %4 = vector.extract_strided_slice %0 {offsets = [3, 0], sizes = [1, 128], strides = [1, 1]} : vector<8x128xf32> to vector<1x128xf32>
    %5 = vector.extract_strided_slice %0 {offsets = [4, 0], sizes = [1, 128], strides = [1, 1]} : vector<8x128xf32> to vector<1x128xf32>
    %6 = vector.extract_strided_slice %0 {offsets = [5, 0], sizes = [1, 128], strides = [1, 1]} : vector<8x128xf32> to vector<1x128xf32>
    %c0_1 = arith.constant 0 : index
    %c0_2 = arith.constant 0 : index
    %7 = vector.load %arg1[%c0_1, %c0_2] : memref<16x128xbf16, #tpu.memory_space<vmem>>, vector<16x128xbf16>
    %c0_3 = arith.constant 0 : index
    %c0_4 = arith.constant 0 : index
    %8 = vector.load %arg2[%c0_3, %c0_4] : memref<128x128xbf16, #tpu.memory_space<vmem>>, vector<128x128xbf16>
    %cst = arith.constant dense<0.000000e+00> : vector<16x128xf32>
    %9 = tpu.matmul %7, %8, %cst {dimension_numbers = #tpu.dot_dimension_numbers<[1], [0], [0], [1], [0, 0, 1, 1], [], []>} : vector<16x128xbf16>, vector<128x128xbf16>, vector<16x128xf32> -> vector<16x128xf32>
    %10 = vector.broadcast %1 : vector<1x128xf32> to vector<16x128xf32>
    %11 = arith.addf %9, %10 : vector<16x128xf32>
    %cst_5 = arith.constant dense<0.000000e+00> : vector<16xf32>
    %12 = vector.multi_reduction <add>, %11, %cst_5 [1] : vector<16x128xf32> to vector<16xf32>
    %13 = vector.shape_cast %12 : vector<16xf32> to vector<16x1xf32>
    %cst_6 = arith.constant 2.000000e-02 : f32
    %14 = vector.broadcast %cst_6 : f32 to vector<16x1xf32>
    %15 = arith.mulf %13, %14 : vector<16x1xf32>
    %16 = arith.mulf %11, %11 : vector<16x128xf32>
    %cst_7 = arith.constant dense<0.000000e+00> : vector<16xf32>
    %17 = vector.multi_reduction <add>, %16, %cst_7 [1] : vector<16x128xf32> to vector<16xf32>
    %18 = vector.shape_cast %17 : vector<16xf32> to vector<16x1xf32>
    %cst_8 = arith.constant 2.000000e-02 : f32
    %19 = vector.broadcast %cst_8 : f32 to vector<16x1xf32>
    %20 = arith.mulf %18, %19 : vector<16x1xf32>
    %21 = arith.mulf %15, %15 : vector<16x1xf32>
    %22 = arith.subf %20, %21 : vector<16x1xf32>
    %cst_9 = arith.constant 0.000000e+00 : f32
    %23 = vector.broadcast %cst_9 : f32 to vector<16x1xf32>
    %24 = arith.maximumf %22, %23 : vector<16x1xf32>
    %25 = vector.broadcast %15 : vector<16x1xf32> to vector<16x128xf32>
    %26 = arith.subf %11, %25 : vector<16x128xf32>
    %cst_10 = arith.constant 9.99999974E-6 : f32
    %27 = vector.broadcast %cst_10 : f32 to vector<16x1xf32>
    %28 = arith.addf %24, %27 : vector<16x1xf32>
    %29 = math.rsqrt %28 : vector<16x1xf32>
    %30 = vector.broadcast %29 : vector<16x1xf32> to vector<16x128xf32>
    %31 = arith.mulf %26, %30 : vector<16x128xf32>
    %32 = vector.broadcast %2 : vector<1x128xf32> to vector<16x128xf32>
    %33 = arith.mulf %31, %32 : vector<16x128xf32>
    %34 = vector.broadcast %3 : vector<1x128xf32> to vector<16x128xf32>
    %35 = arith.addf %33, %34 : vector<16x128xf32>
    %36 = math.tanh %35 : vector<16x128xf32>
    %37 = arith.truncf %36 : vector<16x128xf32> to vector<16x128xbf16>
    %c0_11 = arith.constant 0 : index
    %c0_12 = arith.constant 0 : index
    %38 = vector.load %arg3[%c0_11, %c0_12] : memref<128x128xbf16, #tpu.memory_space<vmem>>, vector<128x128xbf16>
    %cst_13 = arith.constant dense<0.000000e+00> : vector<16x128xf32>
    %39 = tpu.matmul %37, %38, %cst_13 {dimension_numbers = #tpu.dot_dimension_numbers<[1], [0], [0], [1], [0, 0, 1, 1], [], []>} : vector<16x128xbf16>, vector<128x128xbf16>, vector<16x128xf32> -> vector<16x128xf32>
    %40 = vector.broadcast %4 : vector<1x128xf32> to vector<16x128xf32>
    %41 = arith.addf %39, %40 : vector<16x128xf32>
    %cst_14 = arith.constant 0.000000e+00 : f32
    %42 = vector.broadcast %cst_14 : f32 to vector<16x128xf32>
    %43 = arith.maximumf %41, %42 : vector<16x128xf32>
    %44 = arith.truncf %43 : vector<16x128xf32> to vector<16x128xbf16>
    %c0_15 = arith.constant 0 : index
    %c0_16 = arith.constant 0 : index
    %45 = vector.load %arg4[%c0_15, %c0_16] : memref<128x128xbf16, #tpu.memory_space<vmem>>, vector<128x128xbf16>
    %cst_17 = arith.constant dense<0.000000e+00> : vector<16x128xf32>
    %46 = tpu.matmul %44, %45, %cst_17 {dimension_numbers = #tpu.dot_dimension_numbers<[1], [0], [0], [1], [0, 0, 1, 1], [], []>} : vector<16x128xbf16>, vector<128x128xbf16>, vector<16x128xf32> -> vector<16x128xf32>
    %47 = vector.broadcast %5 : vector<1x128xf32> to vector<16x128xf32>
    %48 = arith.addf %46, %47 : vector<16x128xf32>
    %cst_18 = arith.constant 0.000000e+00 : f32
    %49 = vector.broadcast %cst_18 : f32 to vector<16x128xf32>
    %50 = arith.maximumf %48, %49 : vector<16x128xf32>
    %51 = arith.truncf %50 : vector<16x128xf32> to vector<16x128xbf16>
    %c0_19 = arith.constant 0 : index
    %c0_20 = arith.constant 0 : index
    %52 = vector.load %arg5[%c0_19, %c0_20] : memref<128x128xbf16, #tpu.memory_space<vmem>>, vector<128x128xbf16>
    %cst_21 = arith.constant dense<0.000000e+00> : vector<16x128xf32>
    %53 = tpu.matmul %51, %52, %cst_21 {dimension_numbers = #tpu.dot_dimension_numbers<[1], [0], [0], [1], [0, 0, 1, 1], [], []>} : vector<16x128xbf16>, vector<128x128xbf16>, vector<16x128xf32> -> vector<16x128xf32>
    %54 = vector.broadcast %6 : vector<1x128xf32> to vector<16x128xf32>
    %55 = arith.addf %53, %54 : vector<16x128xf32>
    %56 = math.tanh %55 : vector<16x128xf32>
    %c0_22 = arith.constant 0 : index
    %c0_23 = arith.constant 0 : index
    %57 = vector.load %arg7[%c0_22, %c0_23] : memref<16x128xf32, #tpu.memory_space<vmem>>, vector<16x128xf32>
    tpu.vector_store %arg7[%c0_22, %c0_23], %56 {strides = array<i32>} : memref<16x128xf32, #tpu.memory_space<vmem>>, vector<16x128xf32>,
    return
  }
  func.func @transform_0(%arg0: i32) -> (i32, i32) {
    %c0_i32 = arith.constant 0 : i32
    %c0_i32_0 = arith.constant 0 : i32
    return %arg0, %c0_i32 : i32, i32
  }
  func.func @transform_1(%arg0: i32) -> (i32, i32) {
    %c0_i32 = arith.constant 0 : i32
    %c0_i32_0 = arith.constant 0 : i32
    %c0_i32_1 = arith.constant 0 : i32
    return %c0_i32, %c0_i32_0 : i32, i32
  }
  func.func @transform_2(%arg0: i32) -> (i32, i32) {
    %c0_i32 = arith.constant 0 : i32
    %c0_i32_0 = arith.constant 0 : i32
    %c0_i32_1 = arith.constant 0 : i32
    return %c0_i32, %c0_i32_0 : i32, i32
  }
  func.func @transform_3(%arg0: i32) -> (i32, i32) {
    %c0_i32 = arith.constant 0 : i32
    %c0_i32_0 = arith.constant 0 : i32
    %c0_i32_1 = arith.constant 0 : i32
    return %c0_i32, %c0_i32_0 : i32, i32
  }
  func.func @transform_4(%arg0: i32) -> (i32, i32) {
    %c0_i32 = arith.constant 0 : i32
    %c0_i32_0 = arith.constant 0 : i32
    %c0_i32_1 = arith.constant 0 : i32
    return %c0_i32, %c0_i32_0 : i32, i32
  }
  func.func @transform_5(%arg0: i32) -> (i32, i32) {
    %c0_i32 = arith.constant 0 : i32
    %c0_i32_0 = arith.constant 0 : i32
    %c0_i32_1 = arith.constant 0 : i32
    return %c0_i32, %c0_i32_0 : i32, i32
  }
  func.func @transform_6(%arg0: i32) -> (i32, i32) {
    %c0_i32 = arith.constant 0 : i32
    %c0_i32_0 = arith.constant 0 : i32
    return %arg0, %c0_i32 : i32, i32
  }
}

module attributes {stable_mosaic.version = 11 : i64} {
  func.func @ddpg_actor_kernel(%arg0: i32, %arg1: memref<16x128xbf16, #tpu.memory_space<vmem>>, %arg2: memref<128x128xbf16, #tpu.memory_space<vmem>>, %arg3: memref<128x128xbf16, #tpu.memory_space<vmem>>, %arg4: memref<128x128xbf16, #tpu.memory_space<vmem>>, %arg5: memref<128x128xbf16, #tpu.memory_space<vmem>>, %arg6: memref<8x128xf32, #tpu.memory_space<vmem>>, %arg7: memref<16x128xf32, #tpu.memory_space<vmem>>) attributes {dimension_semantics = [#tpu.dimension_semantics<parallel>], iteration_bounds = array<i64: 1>, scalar_prefetch = 0 : i64, scratch_operands = 0 : i64, tpu.core_type = #tpu.core_type<tc>, window_params = [{transform_indices = @transform_0, window_bounds = array<i64: 16, 128>}, {pipeline_mode = #tpu.pipeline_mode<synchronous>, transform_indices = @transform_1, window_bounds = array<i64: 128, 128>}, {pipeline_mode = #tpu.pipeline_mode<synchronous>, transform_indices = @transform_2, window_bounds = array<i64: 128, 128>}, {pipeline_mode = #tpu.pipeline_mode<synchronous>, transform_indices = @transform_3, window_bounds = array<i64: 128, 128>}, {pipeline_mode = #tpu.pipeline_mode<synchronous>, transform_indices = @transform_4, window_bounds = array<i64: 128, 128>}, {pipeline_mode = #tpu.pipeline_mode<synchronous>, transform_indices = @transform_5, window_bounds = array<i64: 8, 128>}, {transform_indices = @transform_6, window_bounds = array<i64: 16, 128>}]} {
    %c0 = arith.constant 0 : index
    %c0_0 = arith.constant 0 : index
    %0 = vector.load %arg6[%c0, %c0_0] : memref<8x128xf32, #tpu.memory_space<vmem>>, vector<8x128xf32>
    %1 = vector.extract_strided_slice %0 {offsets = [0, 0], sizes = [1, 128], strides = [1, 1]} : vector<8x128xf32> to vector<1x128xf32>
    %2 = vector.extract_strided_slice %0 {offsets = [1, 0], sizes = [1, 128], strides = [1, 1]} : vector<8x128xf32> to vector<1x128xf32>
    %3 = vector.extract_strided_slice %0 {offsets = [2, 0], sizes = [1, 128], strides = [1, 1]} : vector<8x128xf32> to vector<1x128xf32>
    %4 = vector.extract_strided_slice %0 {offsets = [3, 0], sizes = [1, 128], strides = [1, 1]} : vector<8x128xf32> to vector<1x128xf32>
    %5 = vector.extract_strided_slice %0 {offsets = [4, 0], sizes = [1, 128], strides = [1, 1]} : vector<8x128xf32> to vector<1x128xf32>
    %6 = vector.extract_strided_slice %0 {offsets = [5, 0], sizes = [1, 128], strides = [1, 1]} : vector<8x128xf32> to vector<1x128xf32>
    %c0_1 = arith.constant 0 : index
    %c0_2 = arith.constant 0 : index
    %7 = vector.load %arg1[%c0_1, %c0_2] : memref<16x128xbf16, #tpu.memory_space<vmem>>, vector<16x128xbf16>
    %c0_3 = arith.constant 0 : index
    %c0_4 = arith.constant 0 : index
    %8 = vector.load %arg2[%c0_3, %c0_4] : memref<128x128xbf16, #tpu.memory_space<vmem>>, vector<128x128xbf16>
    %cst = arith.constant dense<0.000000e+00> : vector<16x128xf32>
    %9 = tpu.matmul %7, %8, %cst {dimension_numbers = #tpu.dot_dimension_numbers<[1], [0], [0], [1], [0, 0, 1, 1], [], []>} : vector<16x128xbf16>, vector<128x128xbf16>, vector<16x128xf32> -> vector<16x128xf32>
    %10 = vector.broadcast %1 : vector<1x128xf32> to vector<16x128xf32>
    %11 = arith.addf %9, %10 : vector<16x128xf32>
    %cst_5 = arith.constant dense<0.000000e+00> : vector<16xf32>
    %12 = vector.multi_reduction <add>, %11, %cst_5 [1] : vector<16x128xf32> to vector<16xf32>
    %13 = vector.shape_cast %12 : vector<16xf32> to vector<16x1xf32>
    %cst_6 = arith.constant 2.000000e-02 : f32
    %14 = vector.broadcast %cst_6 : f32 to vector<16x1xf32>
    %15 = arith.mulf %13, %14 : vector<16x1xf32>
    %16 = arith.mulf %11, %11 : vector<16x128xf32>
    %cst_7 = arith.constant dense<0.000000e+00> : vector<16xf32>
    %17 = vector.multi_reduction <add>, %16, %cst_7 [1] : vector<16x128xf32> to vector<16xf32>
    %18 = vector.shape_cast %17 : vector<16xf32> to vector<16x1xf32>
    %cst_8 = arith.constant 2.000000e-02 : f32
    %19 = vector.broadcast %cst_8 : f32 to vector<16x1xf32>
    %20 = arith.mulf %18, %19 : vector<16x1xf32>
    %21 = arith.mulf %15, %15 : vector<16x1xf32>
    %22 = arith.subf %20, %21 : vector<16x1xf32>
    %cst_9 = arith.constant 0.000000e+00 : f32
    %23 = vector.broadcast %cst_9 : f32 to vector<16x1xf32>
    %24 = arith.maximumf %22, %23 : vector<16x1xf32>
    %25 = vector.broadcast %15 : vector<16x1xf32> to vector<16x128xf32>
    %26 = arith.subf %11, %25 : vector<16x128xf32>
    %cst_10 = arith.constant 9.99999974E-6 : f32
    %27 = vector.broadcast %cst_10 : f32 to vector<16x1xf32>
    %28 = arith.addf %24, %27 : vector<16x1xf32>
    %29 = math.rsqrt %28 : vector<16x1xf32>
    %30 = vector.broadcast %29 : vector<16x1xf32> to vector<16x128xf32>
    %31 = arith.mulf %26, %30 : vector<16x128xf32>
    %32 = vector.broadcast %2 : vector<1x128xf32> to vector<16x128xf32>
    %33 = arith.mulf %31, %32 : vector<16x128xf32>
    %34 = vector.broadcast %3 : vector<1x128xf32> to vector<16x128xf32>
    %35 = arith.addf %33, %34 : vector<16x128xf32>
    %36 = math.tanh %35 : vector<16x128xf32>
    %37 = arith.truncf %36 : vector<16x128xf32> to vector<16x128xbf16>
    %c0_11 = arith.constant 0 : index
    %c0_12 = arith.constant 0 : index
    %38 = vector.load %arg3[%c0_11, %c0_12] : memref<128x128xbf16, #tpu.memory_space<vmem>>, vector<128x128xbf16>
    %cst_13 = arith.constant dense<0.000000e+00> : vector<16x128xf32>
    %39 = tpu.matmul %37, %38, %cst_13 {dimension_numbers = #tpu.dot_dimension_numbers<[1], [0], [0], [1], [0, 0, 1, 1], [], []>} : vector<16x128xbf16>, vector<128x128xbf16>, vector<16x128xf32> -> vector<16x128xf32>
    %40 = vector.broadcast %4 : vector<1x128xf32> to vector<16x128xf32>
    %41 = arith.addf %39, %40 : vector<16x128xf32>
    %cst_14 = arith.constant 0.000000e+00 : f32
    %42 = vector.broadcast %cst_14 : f32 to vector<16x128xf32>
    %43 = arith.maximumf %41, %42 : vector<16x128xf32>
    %44 = arith.truncf %43 : vector<16x128xf32> to vector<16x128xbf16>
    %c0_15 = arith.constant 0 : index
    %c0_16 = arith.constant 0 : index
    %45 = vector.load %arg4[%c0_15, %c0_16] : memref<128x128xbf16, #tpu.memory_space<vmem>>, vector<128x128xbf16>
    %cst_17 = arith.constant dense<0.000000e+00> : vector<16x128xf32>
    %46 = tpu.matmul %44, %45, %cst_17 {dimension_numbers = #tpu.dot_dimension_numbers<[1], [0], [0], [1], [0, 0, 1, 1], [], []>} : vector<16x128xbf16>, vector<128x128xbf16>, vector<16x128xf32> -> vector<16x128xf32>
    %47 = vector.broadcast %5 : vector<1x128xf32> to vector<16x128xf32>
    %48 = arith.addf %46, %47 : vector<16x128xf32>
    %cst_18 = arith.constant 0.000000e+00 : f32
    %49 = vector.broadcast %cst_18 : f32 to vector<16x128xf32>
    %50 = arith.maximumf %48, %49 : vector<16x128xf32>
    %51 = arith.truncf %50 : vector<16x128xf32> to vector<16x128xbf16>
    %c0_19 = arith.constant 0 : index
    %c0_20 = arith.constant 0 : index
    %52 = vector.load %arg5[%c0_19, %c0_20] : memref<128x128xbf16, #tpu.memory_space<vmem>>, vector<128x128xbf16>
    %cst_21 = arith.constant dense<0.000000e+00> : vector<16x128xf32>
    %53 = tpu.matmul %51, %52, %cst_21 {dimension_numbers = #tpu.dot_dimension_numbers<[1], [0], [0], [1], [0, 0, 1, 1], [], []>} : vector<16x128xbf16>, vector<128x128xbf16>, vector<16x128xf32> -> vector<16x128xf32>
    %54 = vector.broadcast %6 : vector<1x128xf32> to vector<16x128xf32>
    %55 = arith.addf %53, %54 : vector<16x128xf32>
    %56 = math.tanh %55 : vector<16x128xf32>
    %c0_22 = arith.constant 0 : index
    %c0_23 = arith.constant 0 : index
    %57 = vector.load %arg7[%c0_22, %c0_23] : memref<16x128xf32, #tpu.memory_space<vmem>>, vector<16x128xf32>
    tpu.vector_store %arg7[%c0_22, %c0_23], %56 {strides = array<i32>} : memref<16x128xf32, #tpu.memory_space<vmem>>, vector<16x128xf32>,
    return
  }
  func.func @transform_0(%arg0: i32) -> (i32, i32) {
    %c0_i32 = arith.constant 0 : i32
    %c0_i32_0 = arith.constant 0 : i32
    return %arg0, %c0_i32 : i32, i32
  }
  func.func @transform_1(%arg0: i32) -> (i32, i32) {
    %c0_i32 = arith.constant 0 : i32
    %c0_i32_0 = arith.constant 0 : i32
    %c0_i32_1 = arith.constant 0 : i32
    return %c0_i32, %c0_i32_0 : i32, i32
  }
  func.func @transform_2(%arg0: i32) -> (i32, i32) {
    %c0_i32 = arith.constant 0 : i32
    %c0_i32_0 = arith.constant 0 : i32
    %c0_i32_1 = arith.constant 0 : i32
    return %c0_i32, %c0_i32_0 : i32, i32
  }
  func.func @transform_3(%arg0: i32) -> (i32, i32) {
    %c0_i32 = arith.constant 0 : i32
    %c0_i32_0 = arith.constant 0 : i32
    %c0_i32_1 = arith.constant 0 : i32
    return %c0_i32, %c0_i32_0 : i32, i32
  }
  func.func @transform_4(%arg0: i32) -> (i32, i32) {
    %c0_i32 = arith.constant 0 : i32
    %c0_i32_0 = arith.constant 0 : i32
    %c0_i32_1 = arith.constant 0 : i32
    return %c0_i32, %c0_i32_0 : i32, i32
  }
  func.func @transform_5(%arg0: i32) -> (i32, i32) {
    %c0_i32 = arith.constant 0 : i32
    %c0_i32_0 = arith.constant 0 : i32
    %c0_i32_1 = arith.constant 0 : i32
    return %c0_i32, %c0_i32_0 : i32, i32
  }
  func.func @transform_6(%arg0: i32) -> (i32, i32) {
    %c0_i32 = arith.constant 0 : i32
    %c0_i32_0 = arith.constant 0 : i32
    return %arg0, %c0_i32 : i32, i32
  }
}

</mosaic_0001>

<llo_original>
// kernel: tpu_custom_call.1
$region0: #{tpu_custom_call.1}
  #allocation0 [shape = 'u32[]', space=smem, size = 0x4, offset = 0x4, fixed_abs, tag = 'smem constant byte address 0x4 - core index']
  #allocation1 [shape = 'u32[144,128]{1,0:T(1,128)}', space=vmem, size = 0x12000, scoped, tag = 'internal scratch']
  %s0 = inlined_call_operand.hbm [shape: bf16[16,128], index: 0, kind: input, shape index: {}]
  %s1 = inlined_call_operand.hbm [shape: bf16[128,128], index: 1, kind: input, shape index: {}]
  %s2 = inlined_call_operand.hbm [shape: bf16[128,128], index: 2, kind: input, shape index: {}]
  %s3 = inlined_call_operand.hbm [shape: bf16[128,128], index: 3, kind: input, shape index: {}]
  %s4 = inlined_call_operand.hbm [shape: bf16[128,128], index: 4, kind: input, shape index: {}]
  %s5 = inlined_call_operand.vmem [shape: f32[8,128], index: 5, kind: input, shape index: {}]
  %s6 = inlined_call_operand.hbm [shape: f32[16,128], index: 6, kind: output, shape index: {}]
  %s7 = sld [smem:[#allocation0]]
  $region54: #{tpu_custom_call.1} parent=0
    _
  %s9 = ssub.s32 1, %s7
  %s10 = scalar_select 0, %s9, %s7
  $region1: #{tpu_custom_call.1} parent=0
    #allocation2 [shape = 'u8[4096]{0}', space=vmem, size = 0x1000, scoped, tag = 'input window, operand 0, single buffered']
    #allocation3 [shape = 's32[1]{0}', space=sflag, size = 0x4, scoped, tag = 'scoped memory for tpu_custom_call.1']
    #allocation4 [shape = 's32[1]{0}', space=sflag, size = 0x4, scoped, tag = 'scoped memory for tpu_custom_call.1']
    #allocation5 [shape = 'u8[32768]{0}', space=vmem, size = 0x8000, scoped, tag = 'input window, operand 1, single buffered']
    #allocation6 [shape = 's32[1]{0}', space=sflag, size = 0x4, scoped, tag = 'scoped memory for tpu_custom_call.1']
    #allocation7 [shape = 'u8[32768]{0}', space=vmem, size = 0x8000, scoped, tag = 'input window, operand 2, single buffered']
    #allocation8 [shape = 'u8[32768]{0}', space=vmem, size = 0x8000, scoped, tag = 'input window, operand 3, single buffered']
    #allocation9 [shape = 's32[1]{0}', space=sflag, size = 0x4, scoped, tag = 'scoped memory for tpu_custom_call.1']
    #allocation10 [shape = 'u8[32768]{0}', space=vmem, size = 0x8000, scoped, tag = 'input window, operand 4, single buffered']
    #allocation11 [shape = 'u8[8192]{0}', space=vmem, size = 0x2000, scoped, tag = 'output window, operand 0, single buffered']
    %11 = vsyncpa [#allocation3], 0
    %12 = vsyncpa [#allocation6], 0
    %13 = vsyncpa [#allocation9], 0
    %14 = vsyncpa [#allocation4], 0
    // Predicated region
    $region2: #{tpu_custom_call.1} parent=1 // pred_check
      _
    $region3: #{tpu_custom_call.1} parent=1 // pred_check_branch
      %16 = sbr.rel (0) target = $region5
    $region4: #{tpu_custom_call.1} parent=1 // pred_region
      %s18 = ssub.s32 128, 128
      %19 = vsyncadd [#allocation3], %s18
      %s20 = sshll.u32 [#allocation2], 4
      %s21 = int_to_ptr.vmem [resolvable:$true] %s20
      %26 = dma.hbm_to_vmem [thread:$0]  %s0, 128, %s21, [#allocation3], 64, 64, 4
    $region5: #{tpu_custom_call.1} parent=1 // pred_fallthru
      _
    // Predicated region
    $region6: #{tpu_custom_call.1} parent=1 // pred_check
      _
    $region7: #{tpu_custom_call.1} parent=1 // pred_check_branch
      %28 = sbr.rel (0) target = $region9
    $region8: #{tpu_custom_call.1} parent=1 // pred_region
      %s30 = ssub.s32 1024, 1024
      %31 = vsyncadd [#allocation6], %s30
      %s32 = sshll.u32 [#allocation5], 4
      %s33 = int_to_ptr.vmem [resolvable:$true] %s32
      %38 = dma.hbm_to_vmem [thread:$0]  %s1, 1024, %s33, [#allocation6], 64, 64, 4
    $region9: #{tpu_custom_call.1} parent=1 // pred_fallthru
      _
    // Predicated region
    $region10: #{tpu_custom_call.1} parent=1 // pred_check
      _
    $region11: #{tpu_custom_call.1} parent=1 // pred_check_branch
      %40 = sbr.rel (0) target = $region13
    $region12: #{tpu_custom_call.1} parent=1 // pred_region
      %s42 = ssub.s32 1024, 1024
      %43 = vsyncadd [#allocation6], %s42
      %s44 = sshll.u32 [#allocation7], 4
      %s45 = int_to_ptr.vmem [resolvable:$true] %s44
      %50 = dma.hbm_to_vmem [thread:$0]  %s2, 1024, %s45, [#allocation6], 64, 64, 4
    $region13: #{tpu_custom_call.1} parent=1 // pred_fallthru
      _
    // Predicated region
    $region14: #{tpu_custom_call.1} parent=1 // pred_check
      _
    $region15: #{tpu_custom_call.1} parent=1 // pred_check_branch
      %52 = sbr.rel (0) target = $region17
    $region16: #{tpu_custom_call.1} parent=1 // pred_region
      %s54 = ssub.s32 1024, 1024
      %55 = vsyncadd [#allocation9], %s54
      %s56 = sshll.u32 [#allocation8], 4
      %s57 = int_to_ptr.vmem [resolvable:$true] %s56
      %62 = dma.hbm_to_vmem [thread:$0]  %s3, 1024, %s57, [#allocation9], 64, 64, 4
    $region17: #{tpu_custom_call.1} parent=1 // pred_fallthru
      _
    // Predicated region
    $region18: #{tpu_custom_call.1} parent=1 // pred_check
      _
    $region19: #{tpu_custom_call.1} parent=1 // pred_check_branch
      %64 = sbr.rel (0) target = $region21
    $region20: #{tpu_custom_call.1} parent=1 // pred_region
      %s66 = ssub.s32 1024, 1024
      %67 = vsyncadd [#allocation9], %s66
      %s68 = sshll.u32 [#allocation10], 4
      %s69 = int_to_ptr.vmem [resolvable:$true] %s68
      %74 = dma.hbm_to_vmem [thread:$0]  %s4, 1024, %s69, [#allocation9], 64, 64, 4
    $region21: #{tpu_custom_call.1} parent=1 // pred_fallthru
      _
    // Predicated region
    $region22: #{tpu_custom_call.1} parent=1 // pred_check
      _
    $region23: #{tpu_custom_call.1} parent=1 // pred_check_branch
      %76 = sbr.rel (0) target = $region25
    $region24: #{tpu_custom_call.1} parent=1 // pred_region
      _
    $region25: #{tpu_custom_call.1} parent=1 // pred_fallthru
      _
    // Predicated region
    $region26: #{tpu_custom_call.1} parent=1 // pred_check
      _
    $region27: #{tpu_custom_call.1} parent=1 // pred_check_branch
      %78 = sbr.rel (0) target = $region29
    $region28: #{tpu_custom_call.1} parent=1 // pred_region
      %79 = dma.done [#allocation3], 128
    $region29: #{tpu_custom_call.1} parent=1 // pred_fallthru
      _
    // Predicated region
    $region30: #{tpu_custom_call.1} parent=1 // pred_check
      _
    $region31: #{tpu_custom_call.1} parent=1 // pred_check_branch
      %81 = sbr.rel (0) target = $region33
    $region32: #{tpu_custom_call.1} parent=1 // pred_region
      %82 = dma.done [#allocation6], 1024
    $region33: #{tpu_custom_call.1} parent=1 // pred_fallthru
      _
    // Predicated region
    $region34: #{tpu_custom_call.1} parent=1 // pred_check
      _
    $region35: #{tpu_custom_call.1} parent=1 // pred_check_branch
      %84 = sbr.rel (0) target = $region37
    $region36: #{tpu_custom_call.1} parent=1 // pred_region
      %85 = dma.done [#allocation6], 1024
    $region37: #{tpu_custom_call.1} parent=1 // pred_fallthru
      _
    // Predicated region
    $region38: #{tpu_custom_call.1} parent=1 // pred_check
      _
    $region39: #{tpu_custom_call.1} parent=1 // pred_check_branch
      %87 = sbr.rel (0) target = $region41
    $region40: #{tpu_custom_call.1} parent=1 // pred_region
      %88 = dma.done [#allocation9], 1024
    $region41: #{tpu_custom_call.1} parent=1 // pred_fallthru
      _
    // Predicated region
    $region42: #{tpu_custom_call.1} parent=1 // pred_check
      _
    $region43: #{tpu_custom_call.1} parent=1 // pred_check_branch
      %90 = sbr.rel (0) target = $region45
    $region44: #{tpu_custom_call.1} parent=1 // pred_region
      %91 = dma.done [#allocation9], 1024
    $region45: #{tpu_custom_call.1} parent=1 // pred_fallthru
      _
    %v93 = vld [vmem:[%s5] sm:$0xff]
    %v94 = vld [vmem:[#allocation2] sm:$0xf]
    %v95 = vld [vmem:[#allocation2 + $0x4] sm:$0xf]
    %v96 = vld [vmem:[#allocation5] sm:$0xf]
    %v97 = vld [vmem:[#allocation5 + $0x4] sm:$0xf]
    %v98 = vld [vmem:[#allocation5 + $0x8] sm:$0xf]
    %v99 = vld [vmem:[#allocation5 + $0xc] sm:$0xf]
    %v100 = vld [vmem:[#allocation5 + $0x10] sm:$0xf]
    %v101 = vld [vmem:[#allocation5 + $0x14] sm:$0xf]
    %v102 = vld [vmem:[#allocation5 + $0x18] sm:$0xf]
    %v103 = vld [vmem:[#allocation5 + $0x1c] sm:$0xf]
    %v104 = vld [vmem:[#allocation5 + $0x20] sm:$0xf]
    %v105 = vld [vmem:[#allocation5 + $0x24] sm:$0xf]
    %v106 = vld [vmem:[#allocation5 + $0x28] sm:$0xf]
    %v107 = vld [vmem:[#allocation5 + $0x2c] sm:$0xf]
    %v108 = vld [vmem:[#allocation5 + $0x30] sm:$0xf]
    %v109 = vld [vmem:[#allocation5 + $0x34] sm:$0xf]
    %v110 = vld [vmem:[#allocation5 + $0x38] sm:$0xf]
    %v111 = vld [vmem:[#allocation5 + $0x3c] sm:$0xf]
    %v112 = vlaneseq
    %v113 = vshrl.u32 %v112, 7
    %v114 = vsub.s32 0, %v113
    %v115 = vrot.slane %v93, %v114
    %v118 = vunpack.c.l.b16 %v94
    %v119 = vunpack.c.l.b16 %v95
    %v120 = vpack.c.b16 %v119, %v118
    %v138 = vunpack.c.l.b16 %v96
    %v139 = vunpack.c.l.b16 %v97
    %v140 = vunpack.c.l.b16 %v98
    %v141 = vunpack.c.l.b16 %v99
    %v142 = vunpack.c.l.b16 %v100
    %v143 = vunpack.c.l.b16 %v101
    %v144 = vunpack.c.l.b16 %v102
    %v145 = vunpack.c.l.b16 %v103
    %v146 = vunpack.c.l.b16 %v104
    %v147 = vunpack.c.l.b16 %v105
    %v148 = vunpack.c.l.b16 %v106
    %v149 = vunpack.c.l.b16 %v107
    %v150 = vunpack.c.l.b16 %v108
    %v151 = vunpack.c.l.b16 %v109
    %v152 = vunpack.c.l.b16 %v110
    %v153 = vunpack.c.l.b16 %v111
    %v154 = vpack.c.b16 %v139, %v138
    %v155 = vpack.c.b16 %v141, %v140
    %v156 = vpack.c.b16 %v143, %v142
    %v157 = vpack.c.b16 %v145, %v144
    %v158 = vpack.c.b16 %v147, %v146
    %v159 = vpack.c.b16 %v149, %v148
    %v160 = vpack.c.b16 %v151, %v150
    %v161 = vpack.c.b16 %v153, %v152
    %170 = vmatprep.subr.bf16.mxu0 0
    %171 = vmatpush1.bf16.msra.mxu0 %v154
    %172 = vmatprep.subr.bf16.mxu0 0
    %173 = vmatpush1.bf16.msra.mxu0 %v155
    %174 = vmatprep.subr.bf16.mxu0 0
    %175 = vmatpush1.bf16.msra.mxu0 %v156
    %176 = vmatprep.subr.bf16.mxu0 0
    %177 = vmatpush1.bf16.msra.mxu0 %v157
    %178 = vmatprep.subr.bf16.mxu0 0
    %179 = vmatpush1.bf16.msra.mxu0 %v158
    %180 = vmatprep.subr.bf16.mxu0 0
    %181 = vmatpush1.bf16.msra.mxu0 %v159
    %182 = vmatprep.subr.bf16.mxu0 0
    %183 = vmatpush1.bf16.msra.mxu0 %v160
    %184 = vmatprep.subr.bf16.mxu0 0
    %185 = vmatpush1.bf16.msra.mxu0 %v161
    %186 = vmatprep.subr.bf16.mxu0 0
    %187 = vmatpush1.bf16.msra.mxu0 0
    %188 = vmatprep.subr.bf16.mxu0 0
    %189 = vmatpush1.bf16.msra.mxu0 0
    %190 = vmatprep.subr.bf16.mxu0 0
    %191 = vmatpush1.bf16.msra.mxu0 0
    %192 = vmatprep.subr.bf16.mxu0 0
    %193 = vmatpush1.bf16.msra.mxu0 0
    %194 = vmatprep.subr.bf16.mxu0 0
    %195 = vmatpush1.bf16.msra.mxu0 0
    %196 = vmatprep.subr.bf16.mxu0 0
    %197 = vmatpush1.bf16.msra.mxu0 0
    %198 = vmatprep.subr.bf16.mxu0 0
    %199 = vmatpush1.bf16.msra.mxu0 0
    %200 = vmatprep.subr.bf16.mxu0 0
    %201 = vmatpush1.bf16.msra.mxu0 0
    %202 = vmatprep.mubr.bf16.mxu0 0
    %203 = vmatmul.mubr.bf16.gmra.mrb[0].mxu0 %v120
    %v204 = vpop.f32.mrb[0].mxu0
    %v205 = vadd.f32 %v115, %v204
    %v206 = vpop.f32.mrb[0].mxu0
    %v207 = vpop.f32.mrb[0].mxu0
    %v208 = vadd.f32 %v115, %v207
    %v209 = vpop.f32.mrb[0].mxu0
    %210 = vdwg.mxu0
    %211 = vadd.xlane.f32.xlu0 %v205
    %v212 = vpop.xlane.xlu0 %211
    %213 = vadd.xlane.f32.xlu0 %v208
    %v214 = vpop.xlane.xlu0 %213
    %v215 = vmul.f32 %v212, 0.02
    %v216 = vmul.f32 %v214, 0.02
    %v217 = vmul.f32 %v205, %v205
    %v218 = vmul.f32 %v208, %v208
    %219 = vadd.xlane.f32.xlu0 %v217
    %v220 = vpop.xlane.xlu0 %219
    %221 = vadd.xlane.f32.xlu0 %v218
    %v222 = vpop.xlane.xlu0 %221
    %v223 = vmul.f32 %v220, 0.02
    %v224 = vmul.f32 %v222, 0.02
    %v225 = vmul.f32 %v215, %v215
    %v226 = vmul.f32 %v216, %v216
    %v227 = vsub.f32 %v223, %v225
    %v228 = vsub.f32 %v224, %v226
    %v229 = vmax.f32 %v227, 0.0
    %v230 = vmax.f32 %v228, 0.0
    %v231 = vsub.f32 %v205, %v215
    %v232 = vsub.f32 %v208, %v216
    %v233 = vadd.f32 %v229, 1e-05
    %v234 = vadd.f32 %v230, 1e-05
    %v235 = vrsqrt.pop %v233
    %v236 = vrsqrt.pop %v234
    %v237 = vmul.f32 %v231, %v235
    %v238 = vmul.f32 %v232, %v236
    %v239 = vlaneseq
    %v240 = vshrl.u32 %v239, 7
    %v241 = vsub.s32 1, %v240
    %v242 = vrot.slane %v93, %v241
    %v243 = vmul.f32 %v237, %v242
    %v244 = vmul.f32 %v238, %v242
    %v245 = vlaneseq
    %v246 = vshrl.u32 %v245, 7
    %v247 = vsub.s32 2, %v246
    %v248 = vrot.slane %v93, %v247
    %v249 = vadd.f32 %v243, %v248
    %v250 = vadd.f32 %v244, %v248
    %v251 = vtanh.pop %v249
    %v252 = vtanh.pop %v250
    %v253 = vpack.c.bf16 %v252, %v251
    %v254 = vld [vmem:[#allocation7] sm:$0xf]
    %v255 = vld [vmem:[#allocation7 + $0x4] sm:$0xf]
    %v256 = vld [vmem:[#allocation7 + $0x8] sm:$0xf]
    %v257 = vld [vmem:[#allocation7 + $0xc] sm:$0xf]
    %v258 = vld [vmem:[#allocation7 + $0x10] sm:$0xf]
    %v259 = vld [vmem:[#allocation7 + $0x14] sm:$0xf]
    %v260 = vld [vmem:[#allocation7 + $0x18] sm:$0xf]
    %v261 = vld [vmem:[#allocation7 + $0x1c] sm:$0xf]
    %v262 = vld [vmem:[#allocation7 + $0x20] sm:$0xf]
    %v263 = vld [vmem:[#allocation7 + $0x24] sm:$0xf]
    %v264 = vld [vmem:[#allocation7 + $0x28] sm:$0xf]
    %v265 = vld [vmem:[#allocation7 + $0x2c] sm:$0xf]
    %v266 = vld [vmem:[#allocation7 + $0x30] sm:$0xf]
    %v267 = vld [vmem:[#allocation7 + $0x34] sm:$0xf]
    %v268 = vld [vmem:[#allocation7 + $0x38] sm:$0xf]
    %v269 = vld [vmem:[#allocation7 + $0x3c] sm:$0xf]
    %v270 = vlaneseq
    %v271 = vshrl.u32 %v270, 7
    %v272 = vsub.s32 3, %v271
    %v273 = vrot.slane %v93, %v272
    %v290 = vunpack.c.l.b16 %v254
    %v291 = vunpack.c.l.b16 %v255
    %v292 = vunpack.c.l.b16 %v256
    %v293 = vunpack.c.l.b16 %v257
    %v294 = vunpack.c.l.b16 %v258
    %v295 = vunpack.c.l.b16 %v259
    %v296 = vunpack.c.l.b16 %v260
    %v297 = vunpack.c.l.b16 %v261
    %v298 = vunpack.c.l.b16 %v262
    %v299 = vunpack.c.l.b16 %v263
    %v300 = vunpack.c.l.b16 %v264
    %v301 = vunpack.c.l.b16 %v265
    %v302 = vunpack.c.l.b16 %v266
    %v303 = vunpack.c.l.b16 %v267
    %v304 = vunpack.c.l.b16 %v268
    %v305 = vunpack.c.l.b16 %v269
    %v306 = vpack.c.b16 %v291, %v290
    %v307 = vpack.c.b16 %v293, %v292
    %v308 = vpack.c.b16 %v295, %v294
    %v309 = vpack.c.b16 %v297, %v296
    %v310 = vpack.c.b16 %v299, %v298
    %v311 = vpack.c.b16 %v301, %v300
    %v312 = vpack.c.b16 %v303, %v302
    %v313 = vpack.c.b16 %v305, %v304
    %322 = vmatprep.subr.bf16.mxu0 0
    %323 = vmatpush1.bf16.msra.mxu0 %v306
    %324 = vmatprep.subr.bf16.mxu0 0
    %325 = vmatpush1.bf16.msra.mxu0 %v307
    %326 = vmatprep.subr.bf16.mxu0 0
    %327 = vmatpush1.bf16.msra.mxu0 %v308
    %328 = vmatprep.subr.bf16.mxu0 0
    %329 = vmatpush1.bf16.msra.mxu0 %v309
    %330 = vmatprep.subr.bf16.mxu0 0
    %331 = vmatpush1.bf16.msra.mxu0 %v310
    %332 = vmatprep.subr.bf16.mxu0 0
    %333 = vmatpush1.bf16.msra.mxu0 %v311
    %334 = vmatprep.subr.bf16.mxu0 0
    %335 = vmatpush1.bf16.msra.mxu0 %v312
    %336 = vmatprep.subr.bf16.mxu0 0
    %337 = vmatpush1.bf16.msra.mxu0 %v313
    %338 = vmatprep.subr.bf16.mxu0 0
    %339 = vmatpush1.bf16.msra.mxu0 0
    %340 = vmatprep.subr.bf16.mxu0 0
    %341 = vmatpush1.bf16.msra.mxu0 0
    %342 = vmatprep.subr.bf16.mxu0 0
    %343 = vmatpush1.bf16.msra.mxu0 0
    %344 = vmatprep.subr.bf16.mxu0 0
    %345 = vmatpush1.bf16.msra.mxu0 0
    %346 = vmatprep.subr.bf16.mxu0 0
    %347 = vmatpush1.bf16.msra.mxu0 0
    %348 = vmatprep.subr.bf16.mxu0 0
    %349 = vmatpush1.bf16.msra.mxu0 0
    %350 = vmatprep.subr.bf16.mxu0 0
    %351 = vmatpush1.bf16.msra.mxu0 0
    %352 = vmatprep.subr.bf16.mxu0 0
    %353 = vmatpush1.bf16.msra.mxu0 0
    %354 = vmatprep.mubr.bf16.mxu0 0
    %355 = vmatmul.mubr.bf16.gmra.mrb[0].mxu0 %v253
    %v356 = vpop.f32.mrb[0].mxu0
    %v357 = vadd.f32 %v273, %v356
    %v358 = vpop.f32.mrb[0].mxu0
    %v359 = vpop.f32.mrb[0].mxu0
    %v360 = vadd.f32 %v273, %v359
    %v361 = vpop.f32.mrb[0].mxu0
    %362 = vdwg.mxu0
    %v363 = vmax.f32 %v357, 0.0
    %v364 = vmax.f32 %v360, 0.0
    %v365 = vpack.c.bf16 %v364, %v363
    %v366 = vld [vmem:[#allocation8] sm:$0xf]
    %v367 = vld [vmem:[#allocation8 + $0x4] sm:$0xf]
    %v368 = vld [vmem:[#allocation8 + $0x8] sm:$0xf]
    %v369 = vld [vmem:[#allocation8 + $0xc] sm:$0xf]
    %v370 = vld [vmem:[#allocation8 + $0x10] sm:$0xf]
    %v371 = vld [vmem:[#allocation8 + $0x14] sm:$0xf]
    %v372 = vld [vmem:[#allocation8 + $0x18] sm:$0xf]
    %v373 = vld [vmem:[#allocation8 + $0x1c] sm:$0xf]
    %v374 = vld [vmem:[#allocation8 + $0x20] sm:$0xf]
    %v375 = vld [vmem:[#allocation8 + $0x24] sm:$0xf]
    %v376 = vld [vmem:[#allocation8 + $0x28] sm:$0xf]
    %v377 = vld [vmem:[#allocation8 + $0x2c] sm:$0xf]
    %v378 = vld [vmem:[#allocation8 + $0x30] sm:$0xf]
    %v379 = vld [vmem:[#allocation8 + $0x34] sm:$0xf]
    %v380 = vld [vmem:[#allocation8 + $0x38] sm:$0xf]
    %v381 = vld [vmem:[#allocation8 + $0x3c] sm:$0xf]
    %v382 = vlaneseq
    %v383 = vshrl.u32 %v382, 7
    %v384 = vsub.s32 4, %v383
    %v385 = vrot.slane %v93, %v384
    %v402 = vunpack.c.l.b16 %v366
    %v403 = vunpack.c.l.b16 %v367
    %v404 = vunpack.c.l.b16 %v368
    %v405 = vunpack.c.l.b16 %v369
    %v406 = vunpack.c.l.b16 %v370
    %v407 = vunpack.c.l.b16 %v371
    %v408 = vunpack.c.l.b16 %v372
    %v409 = vunpack.c.l.b16 %v373
    %v410 = vunpack.c.l.b16 %v374
    %v411 = vunpack.c.l.b16 %v375
    %v412 = vunpack.c.l.b16 %v376
    %v413 = vunpack.c.l.b16 %v377
    %v414 = vunpack.c.l.b16 %v378
    %v415 = vunpack.c.l.b16 %v379
    %v416 = vunpack.c.l.b16 %v380
    %v417 = vunpack.c.l.b16 %v381
    %v418 = vpack.c.b16 %v403, %v402
    %v419 = vpack.c.b16 %v405, %v404
    %v420 = vpack.c.b16 %v407, %v406
    %v421 = vpack.c.b16 %v409, %v408
    %v422 = vpack.c.b16 %v411, %v410
    %v423 = vpack.c.b16 %v413, %v412
    %v424 = vpack.c.b16 %v415, %v414
    %v425 = vpack.c.b16 %v417, %v416
    %434 = vmatprep.subr.bf16.mxu0 0
    %435 = vmatpush1.bf16.msra.mxu0 %v418
    %436 = vmatprep.subr.bf16.mxu0 0
    %437 = vmatpush1.bf16.msra.mxu0 %v419
    %438 = vmatprep.subr.bf16.mxu0 0
    %439 = vmatpush1.bf16.msra.mxu0 %v420
    %440 = vmatprep.subr.bf16.mxu0 0
    %441 = vmatpush1.bf16.msra.mxu0 %v421
    %442 = vmatprep.subr.bf16.mxu0 0
    %443 = vmatpush1.bf16.msra.mxu0 %v422
    %444 = vmatprep.subr.bf16.mxu0 0
    %445 = vmatpush1.bf16.msra.mxu0 %v423
    %446 = vmatprep.subr.bf16.mxu0 0
    %447 = vmatpush1.bf16.msra.mxu0 %v424
    %448 = vmatprep.subr.bf16.mxu0 0
    %449 = vmatpush1.bf16.msra.mxu0 %v425
    %450 = vmatprep.subr.bf16.mxu0 0
    %451 = vmatpush1.bf16.msra.mxu0 0
    %452 = vmatprep.subr.bf16.mxu0 0
    %453 = vmatpush1.bf16.msra.mxu0 0
    %454 = vmatprep.subr.bf16.mxu0 0
    %455 = vmatpush1.bf16.msra.mxu0 0
    %456 = vmatprep.subr.bf16.mxu0 0
    %457 = vmatpush1.bf16.msra.mxu0 0
    %458 = vmatprep.subr.bf16.mxu0 0
    %459 = vmatpush1.bf16.msra.mxu0 0
    %460 = vmatprep.subr.bf16.mxu0 0
    %461 = vmatpush1.bf16.msra.mxu0 0
    %462 = vmatprep.subr.bf16.mxu0 0
    %463 = vmatpush1.bf16.msra.mxu0 0
    %464 = vmatprep.subr.bf16.mxu0 0
    %465 = vmatpush1.bf16.msra.mxu0 0
    %466 = vmatprep.mubr.bf16.mxu0 0
    %467 = vmatmul.mubr.bf16.gmra.mrb[0].mxu0 %v365
    %v468 = vpop.f32.mrb[0].mxu0
    %v469 = vadd.f32 %v385, %v468
    %v470 = vpop.f32.mrb[0].mxu0
    %v471 = vpop.f32.mrb[0].mxu0
    %v472 = vadd.f32 %v385, %v471
    %v473 = vpop.f32.mrb[0].mxu0
    %474 = vdwg.mxu0
    %v475 = vmax.f32 %v469, 0.0
    %v476 = vmax.f32 %v472, 0.0
    %v477 = vpack.c.bf16 %v476, %v475
    %v478 = vld [vmem:[#allocation10] sm:$0xf]
    %v479 = vld [vmem:[#allocation10 + $0x4] sm:$0xf]
    %v480 = vld [vmem:[#allocation10 + $0x8] sm:$0xf]
    %v481 = vld [vmem:[#allocation10 + $0xc] sm:$0xf]
    %v482 = vld [vmem:[#allocation10 + $0x10] sm:$0xf]
    %v483 = vld [vmem:[#allocation10 + $0x14] sm:$0xf]
    %v484 = vld [vmem:[#allocation10 + $0x18] sm:$0xf]
    %v485 = vld [vmem:[#allocation10 + $0x1c] sm:$0xf]
    %v486 = vld [vmem:[#allocation10 + $0x20] sm:$0xf]
    %v487 = vld [vmem:[#allocation10 + $0x24] sm:$0xf]
    %v488 = vld [vmem:[#allocation10 + $0x28] sm:$0xf]
    %v489 = vld [vmem:[#allocation10 + $0x2c] sm:$0xf]
    %v490 = vld [vmem:[#allocation10 + $0x30] sm:$0xf]
    %v491 = vld [vmem:[#allocation10 + $0x34] sm:$0xf]
    %v492 = vld [vmem:[#allocation10 + $0x38] sm:$0xf]
    %v493 = vld [vmem:[#allocation10 + $0x3c] sm:$0xf]
    %v494 = vlaneseq
    %v495 = vshrl.u32 %v494, 7
    %v496 = vsub.s32 5, %v495
    %v497 = vrot.slane %v93, %v496
    %v514 = vunpack.c.l.b16 %v478
    %v515 = vunpack.c.l.b16 %v479
    %v516 = vunpack.c.l.b16 %v480
    %v517 = vunpack.c.l.b16 %v481
    %v518 = vunpack.c.l.b16 %v482
    %v519 = vunpack.c.l.b16 %v483
    %v520 = vunpack.c.l.b16 %v484
    %v521 = vunpack.c.l.b16 %v485
    %v522 = vunpack.c.l.b16 %v486
    %v523 = vunpack.c.l.b16 %v487
    %v524 = vunpack.c.l.b16 %v488
    %v525 = vunpack.c.l.b16 %v489
    %v526 = vunpack.c.l.b16 %v490
    %v527 = vunpack.c.l.b16 %v491
    %v528 = vunpack.c.l.b16 %v492
    %v529 = vunpack.c.l.b16 %v493
    %v530 = vpack.c.b16 %v515, %v514
    %v531 = vpack.c.b16 %v517, %v516
    %v532 = vpack.c.b16 %v519, %v518
    %v533 = vpack.c.b16 %v521, %v520
    %v534 = vpack.c.b16 %v523, %v522
    %v535 = vpack.c.b16 %v525, %v524
    %v536 = vpack.c.b16 %v527, %v526
    %v537 = vpack.c.b16 %v529, %v528
    %546 = vmatprep.subr.bf16.mxu0 0
    %547 = vmatpush1.bf16.msra.mxu0 %v530
    %548 = vmatprep.subr.bf16.mxu0 0
    %549 = vmatpush1.bf16.msra.mxu0 %v531
    %550 = vmatprep.subr.bf16.mxu0 0
    %551 = vmatpush1.bf16.msra.mxu0 %v532
    %552 = vmatprep.subr.bf16.mxu0 0
    %553 = vmatpush1.bf16.msra.mxu0 %v533
    %554 = vmatprep.subr.bf16.mxu0 0
    %555 = vmatpush1.bf16.msra.mxu0 %v534
    %556 = vmatprep.subr.bf16.mxu0 0
    %557 = vmatpush1.bf16.msra.mxu0 %v535
    %558 = vmatprep.subr.bf16.mxu0 0
    %559 = vmatpush1.bf16.msra.mxu0 %v536
    %560 = vmatprep.subr.bf16.mxu0 0
    %561 = vmatpush1.bf16.msra.mxu0 %v537
    %562 = vmatprep.subr.bf16.mxu0 0
    %563 = vmatpush1.bf16.msra.mxu0 0
    %564 = vmatprep.subr.bf16.mxu0 0
    %565 = vmatpush1.bf16.msra.mxu0 0
    %566 = vmatprep.subr.bf16.mxu0 0
    %567 = vmatpush1.bf16.msra.mxu0 0
    %568 = vmatprep.subr.bf16.mxu0 0
    %569 = vmatpush1.bf16.msra.mxu0 0
    %570 = vmatprep.subr.bf16.mxu0 0
    %571 = vmatpush1.bf16.msra.mxu0 0
    %572 = vmatprep.subr.bf16.mxu0 0
    %573 = vmatpush1.bf16.msra.mxu0 0
    %574 = vmatprep.subr.bf16.mxu0 0
    %575 = vmatpush1.bf16.msra.mxu0 0
    %576 = vmatprep.subr.bf16.mxu0 0
    %577 = vmatpush1.bf16.msra.mxu0 0
    %578 = vmatprep.mubr.bf16.mxu0 0
    %579 = vmatmul.mubr.bf16.gmra.mrb[0].mxu0 %v477
    %v580 = vpop.f32.mrb[0].mxu0
    %v581 = vadd.f32 %v497, %v580
    %v582 = vpop.f32.mrb[0].mxu0
    %v583 = vpop.f32.mrb[0].mxu0
    %v584 = vadd.f32 %v497, %v583
    %v585 = vpop.f32.mrb[0].mxu0
    %586 = vdwg.mxu0
    %v587 = vtanh.pop %v581
    %v588 = vtanh.pop %v584
    %589 = vst [vmem:[#allocation11] sm:$0xff] %v587
    %590 = vst [vmem:[#allocation11 + $0x8] sm:$0xff] %v588
    // Predicated region
    $region46: #{tpu_custom_call.1} parent=1 // pred_check
      _
    $region47: #{tpu_custom_call.1} parent=1 // pred_check_branch
      %592 = sbr.rel (0) target = $region49
    $region48: #{tpu_custom_call.1} parent=1 // pred_region
      %s594 = ssub.s32 256, 256
      %595 = vsyncadd [#allocation4], %s594
      %s596 = sshll.u32 [#allocation11], 4
      %s597 = int_to_ptr.vmem [resolvable:$true] %s596
      %602 = dma.vmem_to_hbm [thread:$0]  %s597, 256, %s6, [#allocation4], 128, 128, 8
    $region49: #{tpu_custom_call.1} parent=1 // pred_fallthru
      _
    // Predicated region
    $region50: #{tpu_custom_call.1} parent=1 // pred_check
      _
    $region51: #{tpu_custom_call.1} parent=1 // pred_check_branch
      %604 = sbr.rel (0) target = $region53
    $region52: #{tpu_custom_call.1} parent=1 // pred_region
      %605 = dma.done [#allocation4], 256
    $region53: #{tpu_custom_call.1} parent=1 // pred_fallthru
      _
    %606 = vsyncpa [#allocation3], 1
    %607 = vsyncpa [#allocation6], 1
    %608 = vsyncpa [#allocation9], 1
    %609 = vsyncpa [#allocation4], 1

// kernel: tpu_custom_call.1
$region0: #{tpu_custom_call.1}
  #allocation0 [shape = 'u32[]', space=smem, size = 0x4, offset = 0x4, fixed_abs, tag = 'smem constant byte address 0x4 - core index']
  #allocation1 [shape = 'u32[144,128]{1,0:T(1,128)}', space=vmem, size = 0x12000, scoped, tag = 'internal scratch']
  %s0 = inlined_call_operand.hbm [shape: bf16[16,128], index: 0, kind: input, shape index: {}]
  %s1 = inlined_call_operand.hbm [shape: bf16[128,128], index: 1, kind: input, shape index: {}]
  %s2 = inlined_call_operand.hbm [shape: bf16[128,128], index: 2, kind: input, shape index: {}]
  %s3 = inlined_call_operand.hbm [shape: bf16[128,128], index: 3, kind: input, shape index: {}]
  %s4 = inlined_call_operand.hbm [shape: bf16[128,128], index: 4, kind: input, shape index: {}]
  %s5 = inlined_call_operand.vmem [shape: f32[8,128], index: 5, kind: input, shape index: {}]
  %s6 = inlined_call_operand.hbm [shape: f32[16,128], index: 6, kind: output, shape index: {}]
  %s7 = sld [smem:[#allocation0]]
  $region54: #{tpu_custom_call.1} parent=0
    _
  %s9 = ssub.s32 1, %s7
  %s10 = scalar_select 0, %s9, %s7
  $region1: #{tpu_custom_call.1} parent=0
    #allocation2 [shape = 'u8[4096]{0}', space=vmem, size = 0x1000, scoped, tag = 'input window, operand 0, single buffered']
    #allocation3 [shape = 's32[1]{0}', space=sflag, size = 0x4, scoped, tag = 'scoped memory for tpu_custom_call.1']
    #allocation4 [shape = 's32[1]{0}', space=sflag, size = 0x4, scoped, tag = 'scoped memory for tpu_custom_call.1']
    #allocation5 [shape = 'u8[32768]{0}', space=vmem, size = 0x8000, scoped, tag = 'input window, operand 1, single buffered']
    #allocation6 [shape = 's32[1]{0}', space=sflag, size = 0x4, scoped, tag = 'scoped memory for tpu_custom_call.1']
    #allocation7 [shape = 'u8[32768]{0}', space=vmem, size = 0x8000, scoped, tag = 'input window, operand 2, single buffered']
    #allocation8 [shape = 'u8[32768]{0}', space=vmem, size = 0x8000, scoped, tag = 'input window, operand 3, single buffered']
    #allocation9 [shape = 's32[1]{0}', space=sflag, size = 0x4, scoped, tag = 'scoped memory for tpu_custom_call.1']
    #allocation10 [shape = 'u8[32768]{0}', space=vmem, size = 0x8000, scoped, tag = 'input window, operand 4, single buffered']
    #allocation11 [shape = 'u8[8192]{0}', space=vmem, size = 0x2000, scoped, tag = 'output window, operand 0, single buffered']
    %11 = vsyncpa [#allocation3], 0
    %12 = vsyncpa [#allocation6], 0
    %13 = vsyncpa [#allocation9], 0
    %14 = vsyncpa [#allocation4], 0
    // Predicated region
    $region2: #{tpu_custom_call.1} parent=1 // pred_check
      _
    $region3: #{tpu_custom_call.1} parent=1 // pred_check_branch
      %16 = sbr.rel (0) target = $region5
    $region4: #{tpu_custom_call.1} parent=1 // pred_region
      %s18 = ssub.s32 128, 128
      %19 = vsyncadd [#allocation3], %s18
      %s20 = sshll.u32 [#allocation2], 4
      %s21 = int_to_ptr.vmem [resolvable:$true] %s20
      %26 = dma.hbm_to_vmem [thread:$0]  %s0, 128, %s21, [#allocation3], 64, 64, 4
    $region5: #{tpu_custom_call.1} parent=1 // pred_fallthru
      _
    // Predicated region
    $region6: #{tpu_custom_call.1} parent=1 // pred_check
      _
    $region7: #{tpu_custom_call.1} parent=1 // pred_check_branch
      %28 = sbr.rel (0) target = $region9
    $region8: #{tpu_custom_call.1} parent=1 // pred_region
      %s30 = ssub.s32 1024, 1024
      %31 = vsyncadd [#allocation6], %s30
      %s32 = sshll.u32 [#allocation5], 4
      %s33 = int_to_ptr.vmem [resolvable:$true] %s32
      %38 = dma.hbm_to_vmem [thread:$0]  %s1, 1024, %s33, [#allocation6], 64, 64, 4
    $region9: #{tpu_custom_call.1} parent=1 // pred_fallthru
      _
    // Predicated region
    $region10: #{tpu_custom_call.1} parent=1 // pred_check
      _
    $region11: #{tpu_custom_call.1} parent=1 // pred_check_branch
      %40 = sbr.rel (0) target = $region13
    $region12: #{tpu_custom_call.1} parent=1 // pred_region
      %s42 = ssub.s32 1024, 1024
      %43 = vsyncadd [#allocation6], %s42
      %s44 = sshll.u32 [#allocation7], 4
      %s45 = int_to_ptr.vmem [resolvable:$true] %s44
      %50 = dma.hbm_to_vmem [thread:$0]  %s2, 1024, %s45, [#allocation6], 64, 64, 4
    $region13: #{tpu_custom_call.1} parent=1 // pred_fallthru
      _
    // Predicated region
    $region14: #{tpu_custom_call.1} parent=1 // pred_check
      _
    $region15: #{tpu_custom_call.1} parent=1 // pred_check_branch
      %52 = sbr.rel (0) target = $region17
    $region16: #{tpu_custom_call.1} parent=1 // pred_region
      %s54 = ssub.s32 1024, 1024
      %55 = vsyncadd [#allocation9], %s54
      %s56 = sshll.u32 [#allocation8], 4
      %s57 = int_to_ptr.vmem [resolvable:$true] %s56
      %62 = dma.hbm_to_vmem [thread:$0]  %s3, 1024, %s57, [#allocation9], 64, 64, 4
    $region17: #{tpu_custom_call.1} parent=1 // pred_fallthru
      _
    // Predicated region
    $region18: #{tpu_custom_call.1} parent=1 // pred_check
      _
    $region19: #{tpu_custom_call.1} parent=1 // pred_check_branch
      %64 = sbr.rel (0) target = $region21
    $region20: #{tpu_custom_call.1} parent=1 // pred_region
      %s66 = ssub.s32 1024, 1024
      %67 = vsyncadd [#allocation9], %s66
      %s68 = sshll.u32 [#allocation10], 4
      %s69 = int_to_ptr.vmem [resolvable:$true] %s68
      %74 = dma.hbm_to_vmem [thread:$0]  %s4, 1024, %s69, [#allocation9], 64, 64, 4
    $region21: #{tpu_custom_call.1} parent=1 // pred_fallthru
      _
    // Predicated region
    $region22: #{tpu_custom_call.1} parent=1 // pred_check
      _
    $region23: #{tpu_custom_call.1} parent=1 // pred_check_branch
      %76 = sbr.rel (0) target = $region25
    $region24: #{tpu_custom_call.1} parent=1 // pred_region
      _
    $region25: #{tpu_custom_call.1} parent=1 // pred_fallthru
      _
    // Predicated region
    $region26: #{tpu_custom_call.1} parent=1 // pred_check
      _
    $region27: #{tpu_custom_call.1} parent=1 // pred_check_branch
      %78 = sbr.rel (0) target = $region29
    $region28: #{tpu_custom_call.1} parent=1 // pred_region
      %79 = dma.done [#allocation3], 128
    $region29: #{tpu_custom_call.1} parent=1 // pred_fallthru
      _
    // Predicated region
    $region30: #{tpu_custom_call.1} parent=1 // pred_check
      _
    $region31: #{tpu_custom_call.1} parent=1 // pred_check_branch
      %81 = sbr.rel (0) target = $region33
    $region32: #{tpu_custom_call.1} parent=1 // pred_region
      %82 = dma.done [#allocation6], 1024
    $region33: #{tpu_custom_call.1} parent=1 // pred_fallthru
      _
    // Predicated region
    $region34: #{tpu_custom_call.1} parent=1 // pred_check
      _
    $region35: #{tpu_custom_call.1} parent=1 // pred_check_branch
      %84 = sbr.rel (0) target = $region37
    $region36: #{tpu_custom_call.1} parent=1 // pred_region
      %85 = dma.done [#allocation6], 1024
    $region37: #{tpu_custom_call.1} parent=1 // pred_fallthru
      _
    // Predicated region
    $region38: #{tpu_custom_call.1} parent=1 // pred_check
      _
    $region39: #{tpu_custom_call.1} parent=1 // pred_check_branch
      %87 = sbr.rel (0) target = $region41
    $region40: #{tpu_custom_call.1} parent=1 // pred_region
      %88 = dma.done [#allocation9], 1024
    $region41: #{tpu_custom_call.1} parent=1 // pred_fallthru
      _
    // Predicated region
    $region42: #{tpu_custom_call.1} parent=1 // pred_check
      _
    $region43: #{tpu_custom_call.1} parent=1 // pred_check_branch
      %90 = sbr.rel (0) target = $region45
    $region44: #{tpu_custom_call.1} parent=1 // pred_region
      %91 = dma.done [#allocation9], 1024
    $region45: #{tpu_custom_call.1} parent=1 // pred_fallthru
      _
    %v93 = vld [vmem:[%s5] sm:$0xff]
    %v94 = vld [vmem:[#allocation2] sm:$0xf]
    %v95 = vld [vmem:[#allocation2 + $0x4] sm:$0xf]
    %v96 = vld [vmem:[#allocation5] sm:$0xf]
    %v97 = vld [vmem:[#allocation5 + $0x4] sm:$0xf]
    %v98 = vld [vmem:[#allocation5 + $0x8] sm:$0xf]
    %v99 = vld [vmem:[#allocation5 + $0xc] sm:$0xf]
    %v100 = vld [vmem:[#allocation5 + $0x10] sm:$0xf]
    %v101 = vld [vmem:[#allocation5 + $0x14] sm:$0xf]
    %v102 = vld [vmem:[#allocation5 + $0x18] sm:$0xf]
    %v103 = vld [vmem:[#allocation5 + $0x1c] sm:$0xf]
    %v104 = vld [vmem:[#allocation5 + $0x20] sm:$0xf]
    %v105 = vld [vmem:[#allocation5 + $0x24] sm:$0xf]
    %v106 = vld [vmem:[#allocation5 + $0x28] sm:$0xf]
    %v107 = vld [vmem:[#allocation5 + $0x2c] sm:$0xf]
    %v108 = vld [vmem:[#allocation5 + $0x30] sm:$0xf]
    %v109 = vld [vmem:[#allocation5 + $0x34] sm:$0xf]
    %v110 = vld [vmem:[#allocation5 + $0x38] sm:$0xf]
    %v111 = vld [vmem:[#allocation5 + $0x3c] sm:$0xf]
    %v112 = vlaneseq
    %v113 = vshrl.u32 %v112, 7
    %v114 = vsub.s32 0, %v113
    %v115 = vrot.slane %v93, %v114
    %v118 = vunpack.c.l.b16 %v94
    %v119 = vunpack.c.l.b16 %v95
    %v120 = vpack.c.b16 %v119, %v118
    %v138 = vunpack.c.l.b16 %v96
    %v139 = vunpack.c.l.b16 %v97
    %v140 = vunpack.c.l.b16 %v98
    %v141 = vunpack.c.l.b16 %v99
    %v142 = vunpack.c.l.b16 %v100
    %v143 = vunpack.c.l.b16 %v101
    %v144 = vunpack.c.l.b16 %v102
    %v145 = vunpack.c.l.b16 %v103
    %v146 = vunpack.c.l.b16 %v104
    %v147 = vunpack.c.l.b16 %v105
    %v148 = vunpack.c.l.b16 %v106
    %v149 = vunpack.c.l.b16 %v107
    %v150 = vunpack.c.l.b16 %v108
    %v151 = vunpack.c.l.b16 %v109
    %v152 = vunpack.c.l.b16 %v110
    %v153 = vunpack.c.l.b16 %v111
    %v154 = vpack.c.b16 %v139, %v138
    %v155 = vpack.c.b16 %v141, %v140
    %v156 = vpack.c.b16 %v143, %v142
    %v157 = vpack.c.b16 %v145, %v144
    %v158 = vpack.c.b16 %v147, %v146
    %v159 = vpack.c.b16 %v149, %v148
    %v160 = vpack.c.b16 %v151, %v150
    %v161 = vpack.c.b16 %v153, %v152
    %170 = vmatprep.subr.bf16.mxu0 0
    %171 = vmatpush1.bf16.msra.mxu0 %v154
    %172 = vmatprep.subr.bf16.mxu0 0
    %173 = vmatpush1.bf16.msra.mxu0 %v155
    %174 = vmatprep.subr.bf16.mxu0 0
    %175 = vmatpush1.bf16.msra.mxu0 %v156
    %176 = vmatprep.subr.bf16.mxu0 0
    %177 = vmatpush1.bf16.msra.mxu0 %v157
    %178 = vmatprep.subr.bf16.mxu0 0
    %179 = vmatpush1.bf16.msra.mxu0 %v158
    %180 = vmatprep.subr.bf16.mxu0 0
    %181 = vmatpush1.bf16.msra.mxu0 %v159
    %182 = vmatprep.subr.bf16.mxu0 0
    %183 = vmatpush1.bf16.msra.mxu0 %v160
    %184 = vmatprep.subr.bf16.mxu0 0
    %185 = vmatpush1.bf16.msra.mxu0 %v161
    %186 = vmatprep.subr.bf16.mxu0 0
    %187 = vmatpush1.bf16.msra.mxu0 0
    %188 = vmatprep.subr.bf16.mxu0 0
    %189 = vmatpush1.bf16.msra.mxu0 0
    %190 = vmatprep.subr.bf16.mxu0 0
    %191 = vmatpush1.bf16.msra.mxu0 0
    %192 = vmatprep.subr.bf16.mxu0 0
    %193 = vmatpush1.bf16.msra.mxu0 0
    %194 = vmatprep.subr.bf16.mxu0 0
    %195 = vmatpush1.bf16.msra.mxu0 0
    %196 = vmatprep.subr.bf16.mxu0 0
    %197 = vmatpush1.bf16.msra.mxu0 0
    %198 = vmatprep.subr.bf16.mxu0 0
    %199 = vmatpush1.bf16.msra.mxu0 0
    %200 = vmatprep.subr.bf16.mxu0 0
    %201 = vmatpush1.bf16.msra.mxu0 0
    %202 = vmatprep.mubr.bf16.mxu0 0
    %203 = vmatmul.mubr.bf16.gmra.mrb[0].mxu0 %v120
    %v204 = vpop.f32.mrb[0].mxu0
    %v205 = vadd.f32 %v115, %v204
    %v206 = vpop.f32.mrb[0].mxu0
    %v207 = vpop.f32.mrb[0].mxu0
    %v208 = vadd.f32 %v115, %v207
    %v209 = vpop.f32.mrb[0].mxu0
    %210 = vdwg.mxu0
    %211 = vadd.xlane.f32.xlu0 %v205
    %v212 = vpop.xlane.xlu0 %211
    %213 = vadd.xlane.f32.xlu0 %v208
    %v214 = vpop.xlane.xlu0 %213
    %v215 = vmul.f32 %v212, 0.02
    %v216 = vmul.f32 %v214, 0.02
    %v217 = vmul.f32 %v205, %v205
    %v218 = vmul.f32 %v208, %v208
    %219 = vadd.xlane.f32.xlu0 %v217
    %v220 = vpop.xlane.xlu0 %219
    %221 = vadd.xlane.f32.xlu0 %v218
    %v222 = vpop.xlane.xlu0 %221
    %v223 = vmul.f32 %v220, 0.02
    %v224 = vmul.f32 %v222, 0.02
    %v225 = vmul.f32 %v215, %v215
    %v226 = vmul.f32 %v216, %v216
    %v227 = vsub.f32 %v223, %v225
    %v228 = vsub.f32 %v224, %v226
    %v229 = vmax.f32 %v227, 0.0
    %v230 = vmax.f32 %v228, 0.0
    %v231 = vsub.f32 %v205, %v215
    %v232 = vsub.f32 %v208, %v216
    %v233 = vadd.f32 %v229, 1e-05
    %v234 = vadd.f32 %v230, 1e-05
    %v235 = vrsqrt.pop %v233
    %v236 = vrsqrt.pop %v234
    %v237 = vmul.f32 %v231, %v235
    %v238 = vmul.f32 %v232, %v236
    %v239 = vlaneseq
    %v240 = vshrl.u32 %v239, 7
    %v241 = vsub.s32 1, %v240
    %v242 = vrot.slane %v93, %v241
    %v243 = vmul.f32 %v237, %v242
    %v244 = vmul.f32 %v238, %v242
    %v245 = vlaneseq
    %v246 = vshrl.u32 %v245, 7
    %v247 = vsub.s32 2, %v246
    %v248 = vrot.slane %v93, %v247
    %v249 = vadd.f32 %v243, %v248
    %v250 = vadd.f32 %v244, %v248
    %v251 = vtanh.pop %v249
    %v252 = vtanh.pop %v250
    %v253 = vpack.c.bf16 %v252, %v251
    %v254 = vld [vmem:[#allocation7] sm:$0xf]
    %v255 = vld [vmem:[#allocation7 + $0x4] sm:$0xf]
    %v256 = vld [vmem:[#allocation7 + $0x8] sm:$0xf]
    %v257 = vld [vmem:[#allocation7 + $0xc] sm:$0xf]
    %v258 = vld [vmem:[#allocation7 + $0x10] sm:$0xf]
    %v259 = vld [vmem:[#allocation7 + $0x14] sm:$0xf]
    %v260 = vld [vmem:[#allocation7 + $0x18] sm:$0xf]
    %v261 = vld [vmem:[#allocation7 + $0x1c] sm:$0xf]
    %v262 = vld [vmem:[#allocation7 + $0x20] sm:$0xf]
    %v263 = vld [vmem:[#allocation7 + $0x24] sm:$0xf]
    %v264 = vld [vmem:[#allocation7 + $0x28] sm:$0xf]
    %v265 = vld [vmem:[#allocation7 + $0x2c] sm:$0xf]
    %v266 = vld [vmem:[#allocation7 + $0x30] sm:$0xf]
    %v267 = vld [vmem:[#allocation7 + $0x34] sm:$0xf]
    %v268 = vld [vmem:[#allocation7 + $0x38] sm:$0xf]
    %v269 = vld [vmem:[#allocation7 + $0x3c] sm:$0xf]
    %v270 = vlaneseq
    %v271 = vshrl.u32 %v270, 7
    %v272 = vsub.s32 3, %v271
    %v273 = vrot.slane %v93, %v272
    %v290 = vunpack.c.l.b16 %v254
    %v291 = vunpack.c.l.b16 %v255
    %v292 = vunpack.c.l.b16 %v256
    %v293 = vunpack.c.l.b16 %v257
    %v294 = vunpack.c.l.b16 %v258
    %v295 = vunpack.c.l.b16 %v259
    %v296 = vunpack.c.l.b16 %v260
    %v297 = vunpack.c.l.b16 %v261
    %v298 = vunpack.c.l.b16 %v262
    %v299 = vunpack.c.l.b16 %v263
    %v300 = vunpack.c.l.b16 %v264
    %v301 = vunpack.c.l.b16 %v265
    %v302 = vunpack.c.l.b16 %v266
    %v303 = vunpack.c.l.b16 %v267
    %v304 = vunpack.c.l.b16 %v268
    %v305 = vunpack.c.l.b16 %v269
    %v306 = vpack.c.b16 %v291, %v290
    %v307 = vpack.c.b16 %v293, %v292
    %v308 = vpack.c.b16 %v295, %v294
    %v309 = vpack.c.b16 %v297, %v296
    %v310 = vpack.c.b16 %v299, %v298
    %v311 = vpack.c.b16 %v301, %v300
    %v312 = vpack.c.b16 %v303, %v302
    %v313 = vpack.c.b16 %v305, %v304
    %322 = vmatprep.subr.bf16.mxu0 0
    %323 = vmatpush1.bf16.msra.mxu0 %v306
    %324 = vmatprep.subr.bf16.mxu0 0
    %325 = vmatpush1.bf16.msra.mxu0 %v307
    %326 = vmatprep.subr.bf16.mxu0 0
    %327 = vmatpush1.bf16.msra.mxu0 %v308
    %328 = vmatprep.subr.bf16.mxu0 0
    %329 = vmatpush1.bf16.msra.mxu0 %v309
    %330 = vmatprep.subr.bf16.mxu0 0
    %331 = vmatpush1.bf16.msra.mxu0 %v310
    %332 = vmatprep.subr.bf16.mxu0 0
    %333 = vmatpush1.bf16.msra.mxu0 %v311
    %334 = vmatprep.subr.bf16.mxu0 0
    %335 = vmatpush1.bf16.msra.mxu0 %v312
    %336 = vmatprep.subr.bf16.mxu0 0
    %337 = vmatpush1.bf16.msra.mxu0 %v313
    %338 = vmatprep.subr.bf16.mxu0 0
    %339 = vmatpush1.bf16.msra.mxu0 0
    %340 = vmatprep.subr.bf16.mxu0 0
    %341 = vmatpush1.bf16.msra.mxu0 0
    %342 = vmatprep.subr.bf16.mxu0 0
    %343 = vmatpush1.bf16.msra.mxu0 0
    %344 = vmatprep.subr.bf16.mxu0 0
    %345 = vmatpush1.bf16.msra.mxu0 0
    %346 = vmatprep.subr.bf16.mxu0 0
    %347 = vmatpush1.bf16.msra.mxu0 0
    %348 = vmatprep.subr.bf16.mxu0 0
    %349 = vmatpush1.bf16.msra.mxu0 0
    %350 = vmatprep.subr.bf16.mxu0 0
    %351 = vmatpush1.bf16.msra.mxu0 0
    %352 = vmatprep.subr.bf16.mxu0 0
    %353 = vmatpush1.bf16.msra.mxu0 0
    %354 = vmatprep.mubr.bf16.mxu0 0
    %355 = vmatmul.mubr.bf16.gmra.mrb[0].mxu0 %v253
    %v356 = vpop.f32.mrb[0].mxu0
    %v357 = vadd.f32 %v273, %v356
    %v358 = vpop.f32.mrb[0].mxu0
    %v359 = vpop.f32.mrb[0].mxu0
    %v360 = vadd.f32 %v273, %v359
    %v361 = vpop.f32.mrb[0].mxu0
    %362 = vdwg.mxu0
    %v363 = vmax.f32 %v357, 0.0
    %v364 = vmax.f32 %v360, 0.0
    %v365 = vpack.c.bf16 %v364, %v363
    %v366 = vld [vmem:[#allocation8] sm:$0xf]
    %v367 = vld [vmem:[#allocation8 + $0x4] sm:$0xf]
    %v368 = vld [vmem:[#allocation8 + $0x8] sm:$0xf]
    %v369 = vld [vmem:[#allocation8 + $0xc] sm:$0xf]
    %v370 = vld [vmem:[#allocation8 + $0x10] sm:$0xf]
    %v371 = vld [vmem:[#allocation8 + $0x14] sm:$0xf]
    %v372 = vld [vmem:[#allocation8 + $0x18] sm:$0xf]
    %v373 = vld [vmem:[#allocation8 + $0x1c] sm:$0xf]
    %v374 = vld [vmem:[#allocation8 + $0x20] sm:$0xf]
    %v375 = vld [vmem:[#allocation8 + $0x24] sm:$0xf]
    %v376 = vld [vmem:[#allocation8 + $0x28] sm:$0xf]
    %v377 = vld [vmem:[#allocation8 + $0x2c] sm:$0xf]
    %v378 = vld [vmem:[#allocation8 + $0x30] sm:$0xf]
    %v379 = vld [vmem:[#allocation8 + $0x34] sm:$0xf]
    %v380 = vld [vmem:[#allocation8 + $0x38] sm:$0xf]
    %v381 = vld [vmem:[#allocation8 + $0x3c] sm:$0xf]
    %v382 = vlaneseq
    %v383 = vshrl.u32 %v382, 7
    %v384 = vsub.s32 4, %v383
    %v385 = vrot.slane %v93, %v384
    %v402 = vunpack.c.l.b16 %v366
    %v403 = vunpack.c.l.b16 %v367
    %v404 = vunpack.c.l.b16 %v368
    %v405 = vunpack.c.l.b16 %v369
    %v406 = vunpack.c.l.b16 %v370
    %v407 = vunpack.c.l.b16 %v371
    %v408 = vunpack.c.l.b16 %v372
    %v409 = vunpack.c.l.b16 %v373
    %v410 = vunpack.c.l.b16 %v374
    %v411 = vunpack.c.l.b16 %v375
    %v412 = vunpack.c.l.b16 %v376
    %v413 = vunpack.c.l.b16 %v377
    %v414 = vunpack.c.l.b16 %v378
    %v415 = vunpack.c.l.b16 %v379
    %v416 = vunpack.c.l.b16 %v380
    %v417 = vunpack.c.l.b16 %v381
    %v418 = vpack.c.b16 %v403, %v402
    %v419 = vpack.c.b16 %v405, %v404
    %v420 = vpack.c.b16 %v407, %v406
    %v421 = vpack.c.b16 %v409, %v408
    %v422 = vpack.c.b16 %v411, %v410
    %v423 = vpack.c.b16 %v413, %v412
    %v424 = vpack.c.b16 %v415, %v414
    %v425 = vpack.c.b16 %v417, %v416
    %434 = vmatprep.subr.bf16.mxu0 0
    %435 = vmatpush1.bf16.msra.mxu0 %v418
    %436 = vmatprep.subr.bf16.mxu0 0
    %437 = vmatpush1.bf16.msra.mxu0 %v419
    %438 = vmatprep.subr.bf16.mxu0 0
    %439 = vmatpush1.bf16.msra.mxu0 %v420
    %440 = vmatprep.subr.bf16.mxu0 0
    %441 = vmatpush1.bf16.msra.mxu0 %v421
    %442 = vmatprep.subr.bf16.mxu0 0
    %443 = vmatpush1.bf16.msra.mxu0 %v422
    %444 = vmatprep.subr.bf16.mxu0 0
    %445 = vmatpush1.bf16.msra.mxu0 %v423
    %446 = vmatprep.subr.bf16.mxu0 0
    %447 = vmatpush1.bf16.msra.mxu0 %v424
    %448 = vmatprep.subr.bf16.mxu0 0
    %449 = vmatpush1.bf16.msra.mxu0 %v425
    %450 = vmatprep.subr.bf16.mxu0 0
    %451 = vmatpush1.bf16.msra.mxu0 0
    %452 = vmatprep.subr.bf16.mxu0 0
    %453 = vmatpush1.bf16.msra.mxu0 0
    %454 = vmatprep.subr.bf16.mxu0 0
    %455 = vmatpush1.bf16.msra.mxu0 0
    %456 = vmatprep.subr.bf16.mxu0 0
    %457 = vmatpush1.bf16.msra.mxu0 0
    %458 = vmatprep.subr.bf16.mxu0 0
    %459 = vmatpush1.bf16.msra.mxu0 0
    %460 = vmatprep.subr.bf16.mxu0 0
    %461 = vmatpush1.bf16.msra.mxu0 0
    %462 = vmatprep.subr.bf16.mxu0 0
    %463 = vmatpush1.bf16.msra.mxu0 0
    %464 = vmatprep.subr.bf16.mxu0 0
    %465 = vmatpush1.bf16.msra.mxu0 0
    %466 = vmatprep.mubr.bf16.mxu0 0
    %467 = vmatmul.mubr.bf16.gmra.mrb[0].mxu0 %v365
    %v468 = vpop.f32.mrb[0].mxu0
    %v469 = vadd.f32 %v385, %v468
    %v470 = vpop.f32.mrb[0].mxu0
    %v471 = vpop.f32.mrb[0].mxu0
    %v472 = vadd.f32 %v385, %v471
    %v473 = vpop.f32.mrb[0].mxu0
    %474 = vdwg.mxu0
    %v475 = vmax.f32 %v469, 0.0
    %v476 = vmax.f32 %v472, 0.0
    %v477 = vpack.c.bf16 %v476, %v475
    %v478 = vld [vmem:[#allocation10] sm:$0xf]
    %v479 = vld [vmem:[#allocation10 + $0x4] sm:$0xf]
    %v480 = vld [vmem:[#allocation10 + $0x8] sm:$0xf]
    %v481 = vld [vmem:[#allocation10 + $0xc] sm:$0xf]
    %v482 = vld [vmem:[#allocation10 + $0x10] sm:$0xf]
    %v483 = vld [vmem:[#allocation10 + $0x14] sm:$0xf]
    %v484 = vld [vmem:[#allocation10 + $0x18] sm:$0xf]
    %v485 = vld [vmem:[#allocation10 + $0x1c] sm:$0xf]
    %v486 = vld [vmem:[#allocation10 + $0x20] sm:$0xf]
    %v487 = vld [vmem:[#allocation10 + $0x24] sm:$0xf]
    %v488 = vld [vmem:[#allocation10 + $0x28] sm:$0xf]
    %v489 = vld [vmem:[#allocation10 + $0x2c] sm:$0xf]
    %v490 = vld [vmem:[#allocation10 + $0x30] sm:$0xf]
    %v491 = vld [vmem:[#allocation10 + $0x34] sm:$0xf]
    %v492 = vld [vmem:[#allocation10 + $0x38] sm:$0xf]
    %v493 = vld [vmem:[#allocation10 + $0x3c] sm:$0xf]
    %v494 = vlaneseq
    %v495 = vshrl.u32 %v494, 7
    %v496 = vsub.s32 5, %v495
    %v497 = vrot.slane %v93, %v496
    %v514 = vunpack.c.l.b16 %v478
    %v515 = vunpack.c.l.b16 %v479
    %v516 = vunpack.c.l.b16 %v480
    %v517 = vunpack.c.l.b16 %v481
    %v518 = vunpack.c.l.b16 %v482
    %v519 = vunpack.c.l.b16 %v483
    %v520 = vunpack.c.l.b16 %v484
    %v521 = vunpack.c.l.b16 %v485
    %v522 = vunpack.c.l.b16 %v486
    %v523 = vunpack.c.l.b16 %v487
    %v524 = vunpack.c.l.b16 %v488
    %v525 = vunpack.c.l.b16 %v489
    %v526 = vunpack.c.l.b16 %v490
    %v527 = vunpack.c.l.b16 %v491
    %v528 = vunpack.c.l.b16 %v492
    %v529 = vunpack.c.l.b16 %v493
    %v530 = vpack.c.b16 %v515, %v514
    %v531 = vpack.c.b16 %v517, %v516
    %v532 = vpack.c.b16 %v519, %v518
    %v533 = vpack.c.b16 %v521, %v520
    %v534 = vpack.c.b16 %v523, %v522
    %v535 = vpack.c.b16 %v525, %v524
    %v536 = vpack.c.b16 %v527, %v526
    %v537 = vpack.c.b16 %v529, %v528
    %546 = vmatprep.subr.bf16.mxu0 0
    %547 = vmatpush1.bf16.msra.mxu0 %v530
    %548 = vmatprep.subr.bf16.mxu0 0
    %549 = vmatpush1.bf16.msra.mxu0 %v531
    %550 = vmatprep.subr.bf16.mxu0 0
    %551 = vmatpush1.bf16.msra.mxu0 %v532
    %552 = vmatprep.subr.bf16.mxu0 0
    %553 = vmatpush1.bf16.msra.mxu0 %v533
    %554 = vmatprep.subr.bf16.mxu0 0
    %555 = vmatpush1.bf16.msra.mxu0 %v534
    %556 = vmatprep.subr.bf16.mxu0 0
    %557 = vmatpush1.bf16.msra.mxu0 %v535
    %558 = vmatprep.subr.bf16.mxu0 0
    %559 = vmatpush1.bf16.msra.mxu0 %v536
    %560 = vmatprep.subr.bf16.mxu0 0
    %561 = vmatpush1.bf16.msra.mxu0 %v537
    %562 = vmatprep.subr.bf16.mxu0 0
    %563 = vmatpush1.bf16.msra.mxu0 0
    %564 = vmatprep.subr.bf16.mxu0 0
    %565 = vmatpush1.bf16.msra.mxu0 0
    %566 = vmatprep.subr.bf16.mxu0 0
    %567 = vmatpush1.bf16.msra.mxu0 0
    %568 = vmatprep.subr.bf16.mxu0 0
    %569 = vmatpush1.bf16.msra.mxu0 0
    %570 = vmatprep.subr.bf16.mxu0 0
    %571 = vmatpush1.bf16.msra.mxu0 0
    %572 = vmatprep.subr.bf16.mxu0 0
    %573 = vmatpush1.bf16.msra.mxu0 0
    %574 = vmatprep.subr.bf16.mxu0 0
    %575 = vmatpush1.bf16.msra.mxu0 0
    %576 = vmatprep.subr.bf16.mxu0 0
    %577 = vmatpush1.bf16.msra.mxu0 0
    %578 = vmatprep.mubr.bf16.mxu0 0
    %579 = vmatmul.mubr.bf16.gmra.mrb[0].mxu0 %v477
    %v580 = vpop.f32.mrb[0].mxu0
    %v581 = vadd.f32 %v497, %v580
    %v582 = vpop.f32.mrb[0].mxu0
    %v583 = vpop.f32.mrb[0].mxu0
    %v584 = vadd.f32 %v497, %v583
    %v585 = vpop.f32.mrb[0].mxu0
    %586 = vdwg.mxu0
    %v587 = vtanh.pop %v581
    %v588 = vtanh.pop %v584
    %589 = vst [vmem:[#allocation11] sm:$0xff] %v587
    %590 = vst [vmem:[#allocation11 + $0x8] sm:$0xff] %v588
    // Predicated region
    $region46: #{tpu_custom_call.1} parent=1 // pred_check
      _
    $region47: #{tpu_custom_call.1} parent=1 // pred_check_branch
      %592 = sbr.rel (0) target = $region49
    $region48: #{tpu_custom_call.1} parent=1 // pred_region
      %s594 = ssub.s32 256, 256
      %595 = vsyncadd [#allocation4], %s594
      %s596 = sshll.u32 [#allocation11], 4
      %s597 = int_to_ptr.vmem [resolvable:$true] %s596
      %602 = dma.vmem_to_hbm [thread:$0]  %s597, 256, %s6, [#allocation4], 128, 128, 8
    $region49: #{tpu_custom_call.1} parent=1 // pred_fallthru
      _
    // Predicated region
    $region50: #{tpu_custom_call.1} parent=1 // pred_check
      _
    $region51: #{tpu_custom_call.1} parent=1 // pred_check_branch
      %604 = sbr.rel (0) target = $region53
    $region52: #{tpu_custom_call.1} parent=1 // pred_region
      %605 = dma.done [#allocation4], 256
    $region53: #{tpu_custom_call.1} parent=1 // pred_fallthru
      _
    %606 = vsyncpa [#allocation3], 1
    %607 = vsyncpa [#allocation6], 1
    %608 = vsyncpa [#allocation9], 1
    %609 = vsyncpa [#allocation4], 1

</llo_original>
